<compile_context>
chip_gen: v7x
topology: tpu7x:2x2x1
jax: 0.10.0
libtpu: 0.0.40
codegen_flags: <defaults>
</compile_context>

<pallas_src>
import functools
import math

import jax
import jax.numpy as jnp
from jax import lax
from jax.experimental import pallas as pl
from jax.experimental.pallas import tpu as pltpu
import numpy as np


def _mha_flash_kernel(
    q_ref, k_ref, v_ref, wq_ref, wk_ref, wv_ref, wo_ref,   # inputs
    o_ref,                                                 # output
    qp_ref, m_ref, l_ref, acc_ref, oacc_ref,               # VMEM scratch
    *, tile_q, tile_kv, d_k, causal, compute_dtype, approx_recip):
  qi = pl.program_id(1)
  h = pl.program_id(2)
  kv = pl.program_id(3)
  n_heads = pl.num_programs(2)
  n_kv = pl.num_programs(3)

  q_start = qi * tile_q
  kv_start = kv * tile_kv
  scale = 1.0 / math.sqrt(d_k)

  # ---- per-(b, q_block) init: zero the head-summed output accumulator ------
  @pl.when(jnp.logical_and(h == 0, kv == 0))
  def _init_out():
    oacc_ref[...] = jnp.zeros_like(oacc_ref)

  # ---- per-(b, q_block, head) init: project Q once, reset softmax state ----
  @pl.when(kv == 0)
  def _init_head():
    qp = jnp.dot(q_ref[0].astype(compute_dtype),
                 wq_ref[0].astype(compute_dtype),
                 preferred_element_type=jnp.float32)
    # pre-apply 1/sqrt(d_k) to Q so the big score block needs no extra scale
    qp_ref[...] = (qp * scale).astype(qp_ref.dtype)
    m_ref[...] = jnp.full_like(m_ref, -jnp.inf)
    l_ref[...] = jnp.zeros_like(l_ref)
    acc_ref[...] = jnp.zeros_like(acc_ref)

  # ---- one KV block of online-softmax attention -----------------------------
  def _process_kv_block():
    kp = jnp.dot(k_ref[0].astype(compute_dtype),
                 wk_ref[0].astype(compute_dtype),
                 preferred_element_type=jnp.float32)            # [tile_kv, d_k]
    vp = jnp.dot(v_ref[0].astype(compute_dtype),
                 wv_ref[0].astype(compute_dtype),
                 preferred_element_type=jnp.float32)            # [tile_kv, d_v]

    # scores: contract on d_k directly (no materialized transpose of K)
    s = lax.dot_general(qp_ref[...], kp.astype(compute_dtype),
                        (((1,), (1,)), ((), ())),
                        preferred_element_type=jnp.float32)     # [tile_q, tile_kv]

    if causal:
      # only diagonal-crossing blocks need the iota mask
      def _mask(sc):
        rows = lax.broadcasted_iota(jnp.int32, (tile_q, tile_kv), 0) + q_start
        cols = lax.broadcasted_iota(jnp.int32, (tile_q, tile_kv), 1) + kv_start
        return jnp.where(cols <= rows, sc, -jnp.inf)
      s = lax.cond(kv_start + tile_kv - 1 > q_start, _mask, lambda sc: sc, s)

    m_prev = m_ref[...]
    m_new = jnp.maximum(m_prev, jnp.max(s, axis=-1, keepdims=True))
    alpha = jnp.exp(m_prev - m_new)
    p = jnp.exp(s - m_new)
    l_ref[...] = alpha * l_ref[...] + jnp.sum(p, axis=-1, keepdims=True)
    acc_ref[...] = alpha * acc_ref[...] + jnp.dot(
        p.astype(compute_dtype), vp.astype(compute_dtype),
        preferred_element_type=jnp.float32)
    m_ref[...] = m_new

  if causal:
    # structurally skip KV blocks that lie entirely above the causal diagonal
    pl.when(kv_start < q_start + tile_q)(_process_kv_block)
  else:
    _process_kv_block()

  # ---- finalize: normalize, per-head output projection, sum over heads -----
  @pl.when(kv == n_kv - 1)
  def _finalize():
    if approx_recip:
      inv_l = pl.reciprocal(l_ref[...], approx=True)   # EUP slot, nearly free
    else:
      inv_l = 1.0 / l_ref[...]                         # exact (parity path)
    out_h = (acc_ref[...] * inv_l).astype(compute_dtype)          # [tile_q, d_v]
    oacc_ref[...] += jnp.dot(out_h, wo_ref[0].astype(compute_dtype),
                             preferred_element_type=jnp.float32)  # [tile_q, dim_q]

    @pl.when(h == n_heads - 1)
    def _store():
      o_ref[0] = oacc_ref[...].astype(o_ref.dtype)


def _pick_tile(desired, total):
  t = min(desired, total)
  if total % t != 0:
    # TODO(synk): ragged sequence lengths would need BoundedSlice/masking;
    # fall back to one block covering the whole axis.
    t = total
  return t


def multi_head_attention_pallas(
    q, k, v, wq_t, wk_t, wv_t, wo_t, *, n_head, d_k, d_v, causal,
    tile_q=256, tile_kv=512, compute_dtype=jnp.float32):
  """q,k,v: [B, S, C]; w*_t are nn.Linear weights transposed to [in, out]."""
  B, S_q, dim_q = q.shape
  _, S_kv, dim_kv = k.shape
  assert k.shape == v.shape and k.shape[0] == B
  if causal:
    # the causal mask assumes position-aligned self-attention (q_i vs k_i)
    assert S_q == S_kv

  tile_q = _pick_tile(tile_q, S_q)
  tile_kv = _pick_tile(tile_kv, S_kv)
  n_qb = S_q // tile_q
  n_kvb = S_kv // tile_kv

  cdt = jnp.dtype(compute_dtype)
  is_f32 = cdt == jnp.dtype(jnp.float32)

  # Per-head weight layout [H, in, out]: the kernel runs plain 2-D dots and
  # every weight BlockSpec keeps its last two dims at full extent.
  wq_h = wq_t.reshape(dim_q, n_head, d_k).transpose(1, 0, 2).astype(cdt)
  wk_h = wk_t.reshape(dim_kv, n_head, d_k).transpose(1, 0, 2).astype(cdt)
  wv_h = wv_t.reshape(dim_kv, n_head, d_v).transpose(1, 0, 2).astype(cdt)
  wo_h = wo_t.reshape(n_head, d_v, dim_q).astype(cdt)

  # Cast activations once in the wrapper (halves kernel HBM reads in bf16
  # mode); all MXU accumulation stays f32 inside the kernel.
  qc = q.astype(cdt)
  kc = k.astype(cdt)
  vc = v.astype(cdt)

  kernel = functools.partial(
      _mha_flash_kernel, tile_q=tile_q, tile_kv=tile_kv, d_k=d_k,
      causal=causal, compute_dtype=cdt, approx_recip=not is_f32)

  grid = (B, n_qb, n_head, n_kvb)

  return pl.pallas_call(
      kernel,
      out_shape=jax.ShapeDtypeStruct((B, S_q, dim_q), jnp.float32),
      grid_spec=pltpu.PrefetchScalarGridSpec(
          num_scalar_prefetch=0,
          grid=grid,
          in_specs=[
              # Q block: index ignores (h, kv) -> stays resident, one DMA per (b, qi)
              pl.BlockSpec((1, tile_q, dim_q), lambda b, qi, h, kv: (b, qi, 0)),
              # K / V blocks stream along the innermost kv axis
              pl.BlockSpec((1, tile_kv, dim_kv), lambda b, qi, h, kv: (b, kv, 0)),
              pl.BlockSpec((1, tile_kv, dim_kv), lambda b, qi, h, kv: (b, kv, 0)),
              # per-head weight slices: constant across the innermost kv axis
              pl.BlockSpec((1, dim_q, d_k), lambda b, qi, h, kv: (h, 0, 0)),
              pl.BlockSpec((1, dim_kv, d_k), lambda b, qi, h, kv: (h, 0, 0)),
              pl.BlockSpec((1, dim_kv, d_v), lambda b, qi, h, kv: (h, 0, 0)),
              pl.BlockSpec((1, d_v, dim_q), lambda b, qi, h, kv: (h, 0, 0)),
          ],
          out_specs=pl.BlockSpec((1, tile_q, dim_q),
                                 lambda b, qi, h, kv: (b, qi, 0)),
          scratch_shapes=[
              pltpu.VMEM((tile_q, d_k), cdt),           # projected, scaled Q
              pltpu.VMEM((tile_q, 1), jnp.float32),     # running max  m
              pltpu.VMEM((tile_q, 1), jnp.float32),     # running sum  l
              pltpu.VMEM((tile_q, d_v), jnp.float32),   # softmax-weighted V acc
              pltpu.VMEM((tile_q, dim_q), jnp.float32), # head-summed output acc
          ]),
      compiler_params=pltpu.CompilerParams(
          # (batch, q_block) independent; (head, kv) carry accumulator state.
          dimension_semantics=("parallel", "parallel", "arbitrary", "arbitrary"),
          # above the 16/32 MiB defaults, under v7x's 64 MiB physical VMEM.
          vmem_limit_bytes=48 * 1024 * 1024),
  )(qc, kc, vc, wq_h, wk_h, wv_h, wo_h)


def reference_mha(q, k, v, wq_t, wk_t, wv_t, wo_t, *, n_head, d_k, d_v, causal):
  """Pure-JAX reference mirroring the PyTorch forward (decode_step=None)."""
  B, S_q, _ = q.shape
  S_kv = k.shape[1]
  qp = (q @ wq_t).reshape(B, S_q, n_head, d_k).transpose(0, 2, 1, 3)
  kp = (k @ wk_t).reshape(B, S_kv, n_head, d_k).transpose(0, 2, 1, 3)
  vp = (v @ wv_t).reshape(B, S_kv, n_head, d_v).transpose(0, 2, 1, 3)
  attn = jnp.einsum('bhqd,bhkd->bhqk', qp, kp) / math.sqrt(d_k)
  if causal:
    mask = jnp.tril(jnp.ones((S_q, S_kv), dtype=bool))
    attn = jnp.where(mask[None, None], attn, -jnp.inf)
  p = jax.nn.softmax(attn, axis=-1)
  a = jnp.einsum('bhqk,bhkd->bhqd', p, vp)
  a = a.transpose(0, 2, 1, 3).reshape(B, S_q, n_head * d_v)
  return a @ wo_t


if __name__ == "__main__":
  # Module config: shape=(4,4) -> S=16, dim_q=dim_kv=32, n_head=2,
  # proj_qk_dim=proj_v_dim=16, n_layer=4, causal=True, attn_type='full',
  # attn_kwargs={'attn_dropout': 0.0}.
  B = 2
  shape = (4, 4)
  S = int(np.prod(shape))
  dim_q = dim_kv = 32
  n_head = 2
  d_k = d_v = 16
  n_layer = 4
  causal = True

  key = jax.random.PRNGKey(0)
  k_x, k_wq, k_wk, k_wv, k_wo = jax.random.split(key, 5)

  # Inputs: [b, d1, ..., dn, c]  (self-attention: q = k = v)
  x = jax.random.normal(k_x, (B,) + shape + (dim_q,), dtype=jnp.float32)

  # nn.Linear weight is [out, in] (bias=False); we store the transpose [in, out].
  wq_t = (jax.random.normal(k_wq, (n_head * d_k, dim_q)) / math.sqrt(dim_q)).T.astype(jnp.float32)
  wk_t = (jax.random.normal(k_wk, (n_head * d_k, dim_kv)) / math.sqrt(dim_kv)).T.astype(jnp.float32)
  wv_t = (jax.random.normal(k_wv, (n_head * d_v, dim_kv)) / math.sqrt(dim_kv)).T.astype(jnp.float32)
  wo_t = (jax.random.normal(k_wo, (dim_q, n_head * d_v)) / math.sqrt(dim_q * n_layer)).T.astype(jnp.float32)

  # Flatten spatial dims -> [B, S, C]
  q_flat = x.reshape(B, S, dim_q)
  k_flat = x.reshape(B, S, dim_kv)
  v_flat = x.reshape(B, S, dim_kv)

  ref = reference_mha(q_flat, k_flat, v_flat, wq_t, wk_t, wv_t, wo_t,
                      n_head=n_head, d_k=d_k, d_v=d_v, causal=causal)
  ref = jax.block_until_ready(ref)

  # Strict parity path: f32 matmul operands, exact reciprocal.
  out_f32 = multi_head_attention_pallas(
      q_flat, k_flat, v_flat, wq_t, wk_t, wv_t, wo_t,
      n_head=n_head, d_k=d_k, d_v=d_v, causal=causal,
      compute_dtype=jnp.float32)
  out_f32 = jax.block_until_ready(out_f32)
  np.testing.assert_allclose(np.asarray(out_f32), np.asarray(ref),
                             rtol=2e-3, atol=2e-3)

  # Fast path (v6e/v7x): bf16 MXU operands with f32 accumulation + approx
  # reciprocal; compared against the f32 reference at bf16-level tolerance.
  out_bf16 = multi_head_attention_pallas(
      q_flat, k_flat, v_flat, wq_t, wk_t, wv_t, wo_t,
      n_head=n_head, d_k=d_k, d_v=d_v, causal=causal,
      compute_dtype=jnp.bfloat16)
  out_bf16 = jax.block_until_ready(out_bf16)
  np.testing.assert_allclose(np.asarray(out_bf16), np.asarray(ref),
                             rtol=5e-2, atol=5e-2)

  # Restore original [b, d1, ..., dn, dim_q] layout.
  out_nd = out_f32.reshape((B,) + shape + (dim_q,))
  assert out_nd.shape == (B,) + shape + (dim_q,)

  print("KERNEL_OK")
</pallas_src>

<mosaic_0001>
module attributes {stable_mosaic.version = 11 : i64} {
  func.func @_mha_flash_kernel(%arg0: i32, %arg1: i32, %arg2: i32, %arg3: i32, %arg4: memref<1x16x32xf32, #tpu.memory_space<vmem>>, %arg5: memref<1x16x32xf32, #tpu.memory_space<vmem>>, %arg6: memref<1x16x32xf32, #tpu.memory_space<vmem>>, %arg7: memref<1x32x16xf32, #tpu.memory_space<vmem>>, %arg8: memref<1x32x16xf32, #tpu.memory_space<vmem>>, %arg9: memref<1x32x16xf32, #tpu.memory_space<vmem>>, %arg10: memref<1x16x32xf32, #tpu.memory_space<vmem>>, %arg11: memref<1x16x32xf32, #tpu.memory_space<vmem>>, %arg12: memref<16x16xf32, #tpu.memory_space<vmem>>, %arg13: memref<16x1xf32, #tpu.memory_space<vmem>>, %arg14: memref<16x1xf32, #tpu.memory_space<vmem>>, %arg15: memref<16x16xf32, #tpu.memory_space<vmem>>, %arg16: memref<16x32xf32, #tpu.memory_space<vmem>>) attributes {dimension_semantics = [#tpu.dimension_semantics<parallel>, #tpu.dimension_semantics<parallel>, #tpu.dimension_semantics<arbitrary>, #tpu.dimension_semantics<arbitrary>], iteration_bounds = array<i64: 2, 1, 2, 1>, scalar_prefetch = 0 : i64, scratch_operands = 5 : i64, tpu.core_type = #tpu.core_type<tc>, window_params = [{transform_indices = @transform_0, window_bounds = array<i64: 1, 16, 32>}, {transform_indices = @transform_1, window_bounds = array<i64: 1, 16, 32>}, {transform_indices = @transform_2, window_bounds = array<i64: 1, 16, 32>}, {transform_indices = @transform_3, window_bounds = array<i64: 1, 32, 16>}, {transform_indices = @transform_4, window_bounds = array<i64: 1, 32, 16>}, {transform_indices = @transform_5, window_bounds = array<i64: 1, 32, 16>}, {transform_indices = @transform_6, window_bounds = array<i64: 1, 16, 32>}, {transform_indices = @transform_7, window_bounds = array<i64: 1, 16, 32>}]} {
    %c16_i32 = arith.constant 16 : i32
    %0 = arith.muli %arg1, %c16_i32 : i32
    %c16_i32_0 = arith.constant 16 : i32
    %1 = arith.muli %arg3, %c16_i32_0 : i32
    %c0_i32 = arith.constant 0 : i32
    %2 = arith.cmpi eq, %arg2, %c0_i32 : i32
    %c0_i32_1 = arith.constant 0 : i32
    %3 = arith.cmpi eq, %arg3, %c0_i32_1 : i32
    %4 = arith.andi %2, %3 : i1
    %5 = arith.extui %4 : i1 to i32
    %c0_i32_2 = arith.constant 0 : i32
    %6 = arith.cmpi ne, %5, %c0_i32_2 : i32
    scf.if %6 {
      %cst = arith.constant 0.000000e+00 : f32
      %17 = vector.broadcast %cst : f32 to vector<16x32xf32>
      %c0 = arith.constant 0 : index
      %c0_9 = arith.constant 0 : index
      %18 = vector.load %arg16[%c0, %c0_9] : memref<16x32xf32, #tpu.memory_space<vmem>>, vector<16x32xf32>
      tpu.vector_store %arg16[%c0, %c0_9], %17 {strides = array<i32>} : memref<16x32xf32, #tpu.memory_space<vmem>>, vector<16x32xf32>,
    } else {
    }
    %c0_i32_3 = arith.constant 0 : i32
    %7 = arith.cmpi eq, %arg3, %c0_i32_3 : i32
    %8 = arith.extui %7 : i1 to i32
    %c0_i32_4 = arith.constant 0 : i32
    %9 = arith.cmpi ne, %8, %c0_i32_4 : i32
    scf.if %9 {
      %c0 = arith.constant 0 : index
      %c0_9 = arith.constant 0 : index
      %c0_10 = arith.constant 0 : index
      %17 = vector.load %arg4[%c0, %c0_9, %c0_10] : memref<1x16x32xf32, #tpu.memory_space<vmem>>, vector<1x16x32xf32>
      %18 = vector.shape_cast %17 : vector<1x16x32xf32> to vector<16x32xf32>
      %c0_11 = arith.constant 0 : index
      %c0_12 = arith.constant 0 : index
      %c0_13 = arith.constant 0 : index
      %19 = vector.load %arg7[%c0_11, %c0_12, %c0_13] : memref<1x32x16xf32, #tpu.memory_space<vmem>>, vector<1x32x16xf32>
      %20 = vector.shape_cast %19 : vector<1x32x16xf32> to vector<32x16xf32>
      %cst = arith.constant dense<0.000000e+00> : vector<16x16xf32>
      %21 = tpu.matmul %18, %20, %cst {dimension_numbers = #tpu.dot_dimension_numbers<[1], [0], [0], [1], [0, 0, 1, 1], [], []>} : vector<16x32xf32>, vector<32x16xf32>, vector<16x16xf32> -> vector<16x16xf32>
      %cst_14 = arith.constant 2.500000e-01 : f32
      %22 = vector.broadcast %cst_14 : f32 to vector<16x16xf32>
      %23 = arith.mulf %21, %22 : vector<16x16xf32>
      %c0_15 = arith.constant 0 : index
      %c0_16 = arith.constant 0 : index
      %24 = vector.load %arg12[%c0_15, %c0_16] : memref<16x16xf32, #tpu.memory_space<vmem>>, vector<16x16xf32>
      tpu.vector_store %arg12[%c0_15, %c0_16], %23 {strides = array<i32>} : memref<16x16xf32, #tpu.memory_space<vmem>>, vector<16x16xf32>,
      %cst_17 = arith.constant 0xFF800000 : f32
      %25 = vector.broadcast %cst_17 : f32 to vector<16x1xf32>
      %c0_18 = arith.constant 0 : index
      %c0_19 = arith.constant 0 : index
      %26 = vector.load %arg13[%c0_18, %c0_19] : memref<16x1xf32, #tpu.memory_space<vmem>>, vector<16x1xf32>
      tpu.vector_store %arg13[%c0_18, %c0_19], %25 {strides = array<i32>} : memref<16x1xf32, #tpu.memory_space<vmem>>, vector<16x1xf32>,
      %cst_20 = arith.constant 0.000000e+00 : f32
      %27 = vector.broadcast %cst_20 : f32 to vector<16x1xf32>
      %c0_21 = arith.constant 0 : index
      %c0_22 = arith.constant 0 : index
      %28 = vector.load %arg14[%c0_21, %c0_22] : memref<16x1xf32, #tpu.memory_space<vmem>>, vector<16x1xf32>
      tpu.vector_store %arg14[%c0_21, %c0_22], %27 {strides = array<i32>} : memref<16x1xf32, #tpu.memory_space<vmem>>, vector<16x1xf32>,
      %cst_23 = arith.constant 0.000000e+00 : f32
      %29 = vector.broadcast %cst_23 : f32 to vector<16x16xf32>
      %c0_24 = arith.constant 0 : index
      %c0_25 = arith.constant 0 : index
      %30 = vector.load %arg15[%c0_24, %c0_25] : memref<16x16xf32, #tpu.memory_space<vmem>>, vector<16x16xf32>
      tpu.vector_store %arg15[%c0_24, %c0_25], %29 {strides = array<i32>} : memref<16x16xf32, #tpu.memory_space<vmem>>, vector<16x16xf32>,
    } else {
    }
    %c16_i32_5 = arith.constant 16 : i32
    %10 = arith.addi %0, %c16_i32_5 : i32
    %11 = arith.cmpi slt, %1, %10 : i32
    %12 = arith.extui %11 : i1 to i32
    %c0_i32_6 = arith.constant 0 : i32
    %13 = arith.cmpi ne, %12, %c0_i32_6 : i32
    scf.if %13 {
      %c0 = arith.constant 0 : index
      %c0_9 = arith.constant 0 : index
      %c0_10 = arith.constant 0 : index
      %17 = vector.load %arg5[%c0, %c0_9, %c0_10] : memref<1x16x32xf32, #tpu.memory_space<vmem>>, vector<1x16x32xf32>
      %18 = vector.shape_cast %17 : vector<1x16x32xf32> to vector<16x32xf32>
      %c0_11 = arith.constant 0 : index
      %c0_12 = arith.constant 0 : index
      %c0_13 = arith.constant 0 : index
      %19 = vector.load %arg8[%c0_11, %c0_12, %c0_13] : memref<1x32x16xf32, #tpu.memory_space<vmem>>, vector<1x32x16xf32>
      %20 = vector.shape_cast %19 : vector<1x32x16xf32> to vector<32x16xf32>
      %cst = arith.constant dense<0.000000e+00> : vector<16x16xf32>
      %21 = tpu.matmul %18, %20, %cst {dimension_numbers = #tpu.dot_dimension_numbers<[1], [0], [0], [1], [0, 0, 1, 1], [], []>} : vector<16x32xf32>, vector<32x16xf32>, vector<16x16xf32> -> vector<16x16xf32>
      %c0_14 = arith.constant 0 : index
      %c0_15 = arith.constant 0 : index
      %c0_16 = arith.constant 0 : index
      %22 = vector.load %arg6[%c0_14, %c0_15, %c0_16] : memref<1x16x32xf32, #tpu.memory_space<vmem>>, vector<1x16x32xf32>
      %23 = vector.shape_cast %22 : vector<1x16x32xf32> to vector<16x32xf32>
      %c0_17 = arith.constant 0 : index
      %c0_18 = arith.constant 0 : index
      %c0_19 = arith.constant 0 : index
      %24 = vector.load %arg9[%c0_17, %c0_18, %c0_19] : memref<1x32x16xf32, #tpu.memory_space<vmem>>, vector<1x32x16xf32>
      %25 = vector.shape_cast %24 : vector<1x32x16xf32> to vector<32x16xf32>
      %cst_20 = arith.constant dense<0.000000e+00> : vector<16x16xf32>
      %26 = tpu.matmul %23, %25, %cst_20 {dimension_numbers = #tpu.dot_dimension_numbers<[1], [0], [0], [1], [0, 0, 1, 1], [], []>} : vector<16x32xf32>, vector<32x16xf32>, vector<16x16xf32> -> vector<16x16xf32>
      %c0_21 = arith.constant 0 : index
      %c0_22 = arith.constant 0 : index
      %27 = vector.load %arg12[%c0_21, %c0_22] : memref<16x16xf32, #tpu.memory_space<vmem>>, vector<16x16xf32>
      %cst_23 = arith.constant dense<0.000000e+00> : vector<16x16xf32>
      %28 = tpu.matmul %27, %21, %cst_23 {dimension_numbers = #tpu.dot_dimension_numbers<[1], [1], [0], [0], [0, 0, 1, 0], [], []>} : vector<16x16xf32>, vector<16x16xf32>, vector<16x16xf32> -> vector<16x16xf32>
      %c16_i32_24 = arith.constant 16 : i32
      %29 = arith.addi %1, %c16_i32_24 : i32
      %c1_i32 = arith.constant 1 : i32
      %30 = arith.subi %29, %c1_i32 : i32
      %31 = arith.cmpi sgt, %30, %0 : i32
      %32 = arith.extui %31 : i1 to i32
      %c0_i32_25 = arith.constant 0 : i32
      %33 = arith.cmpi ne, %32, %c0_i32_25 : i32
      %34 = scf.if %33 -> (vector<16x16xf32>) {
        %57 = tpu.iota {dimensions = array<i32: 0>} : vector<16x16xi32>
        %58 = vector.broadcast %0 : i32 to vector<16x16xi32>
        %59 = arith.addi %57, %58 : vector<16x16xi32>
        %60 = tpu.iota {dimensions = array<i32: 1>} : vector<16x16xi32>
        %61 = vector.broadcast %1 : i32 to vector<16x16xi32>
        %62 = arith.addi %60, %61 : vector<16x16xi32>
        %63 = arith.cmpi sle, %62, %59 : vector<16x16xi32>
        %cst_41 = arith.constant 0xFF800000 : f32
        %64 = vector.broadcast %cst_41 : f32 to vector<16x16xf32>
        %65 = arith.select %63, %28, %64 : vector<16x16xi1>, vector<16x16xf32>
        scf.yield %65 : vector<16x16xf32>
      } else {
        scf.yield %28 : vector<16x16xf32>
      }
      %c0_26 = arith.constant 0 : index
      %c0_27 = arith.constant 0 : index
      %35 = vector.load %arg13[%c0_26, %c0_27] : memref<16x1xf32, #tpu.memory_space<vmem>>, vector<16x1xf32>
      %cst_28 = arith.constant dense<0xFF800000> : vector<16xf32>
      %36 = vector.multi_reduction <maximumf>, %34, %cst_28 [1] : vector<16x16xf32> to vector<16xf32>
      %37 = vector.shape_cast %36 : vector<16xf32> to vector<16x1xf32>
      %38 = arith.maximumf %35, %37 : vector<16x1xf32>
      %39 = arith.subf %35, %38 : vector<16x1xf32>
      %40 = math.exp %39 : vector<16x1xf32>
      %41 = vector.broadcast %38 : vector<16x1xf32> to vector<16x16xf32>
      %42 = arith.subf %34, %41 : vector<16x16xf32>
      %43 = math.exp %42 : vector<16x16xf32>
      %c0_29 = arith.constant 0 : index
      %c0_30 = arith.constant 0 : index
      %44 = vector.load %arg14[%c0_29, %c0_30] : memref<16x1xf32, #tpu.memory_space<vmem>>, vector<16x1xf32>
      %45 = arith.mulf %40, %44 : vector<16x1xf32>
      %cst_31 = arith.constant dense<0.000000e+00> : vector<16xf32>
      %46 = vector.multi_reduction <add>, %43, %cst_31 [1] : vector<16x16xf32> to vector<16xf32>
      %47 = vector.shape_cast %46 : vector<16xf32> to vector<16x1xf32>
      %48 = arith.addf %45, %47 : vector<16x1xf32>
      %c0_32 = arith.constant 0 : index
      %c0_33 = arith.constant 0 : index
      %49 = vector.load %arg14[%c0_32, %c0_33] : memref<16x1xf32, #tpu.memory_space<vmem>>, vector<16x1xf32>
      tpu.vector_store %arg14[%c0_32, %c0_33], %48 {strides = array<i32>} : memref<16x1xf32, #tpu.memory_space<vmem>>, vector<16x1xf32>,
      %c0_34 = arith.constant 0 : index
      %c0_35 = arith.constant 0 : index
      %50 = vector.load %arg15[%c0_34, %c0_35] : memref<16x16xf32, #tpu.memory_space<vmem>>, vector<16x16xf32>
      %51 = vector.broadcast %40 : vector<16x1xf32> to vector<16x16xf32>
      %52 = arith.mulf %51, %50 : vector<16x16xf32>
      %cst_36 = arith.constant dense<0.000000e+00> : vector<16x16xf32>
      %53 = tpu.matmul %43, %26, %cst_36 {dimension_numbers = #tpu.dot_dimension_numbers<[1], [0], [0], [1], [0, 0, 1, 1], [], []>} : vector<16x16xf32>, vector<16x16xf32>, vector<16x16xf32> -> vector<16x16xf32>
      %54 = arith.addf %52, %53 : vector<16x16xf32>
      %c0_37 = arith.constant 0 : index
      %c0_38 = arith.constant 0 : index
      %55 = vector.load %arg15[%c0_37, %c0_38] : memref<16x16xf32, #tpu.memory_space<vmem>>, vector<16x16xf32>
      tpu.vector_store %arg15[%c0_37, %c0_38], %54 {strides = array<i32>} : memref<16x16xf32, #tpu.memory_space<vmem>>, vector<16x16xf32>,
      %c0_39 = arith.constant 0 : index
      %c0_40 = arith.constant 0 : index
      %56 = vector.load %arg13[%c0_39, %c0_40] : memref<16x1xf32, #tpu.memory_space<vmem>>, vector<16x1xf32>
      tpu.vector_store %arg13[%c0_39, %c0_40], %38 {strides = array<i32>} : memref<16x1xf32, #tpu.memory_space<vmem>>, vector<16x1xf32>,
    } else {
    }
    %c0_i32_7 = arith.constant 0 : i32
    %14 = arith.cmpi eq, %arg3, %c0_i32_7 : i32
    %15 = arith.extui %14 : i1 to i32
    %c0_i32_8 = arith.constant 0 : i32
    %16 = arith.cmpi ne, %15, %c0_i32_8 : i32
    scf.if %16 {
      %c0 = arith.constant 0 : index
      %c0_9 = arith.constant 0 : index
      %17 = vector.load %arg14[%c0, %c0_9] : memref<16x1xf32, #tpu.memory_space<vmem>>, vector<16x1xf32>
      %cst = arith.constant 1.000000e+00 : f32
      %18 = vector.broadcast %cst : f32 to vector<16x1xf32>
      %19 = arith.divf %18, %17 : vector<16x1xf32>
      %c0_10 = arith.constant 0 : index
      %c0_11 = arith.constant 0 : index
      %20 = vector.load %arg15[%c0_10, %c0_11] : memref<16x16xf32, #tpu.memory_space<vmem>>, vector<16x16xf32>
      %21 = vector.broadcast %19 : vector<16x1xf32> to vector<16x16xf32>
      %22 = arith.mulf %20, %21 : vector<16x16xf32>
      %c0_12 = arith.constant 0 : index
      %c0_13 = arith.constant 0 : index
      %23 = vector.load %arg16[%c0_12, %c0_13] : memref<16x32xf32, #tpu.memory_space<vmem>>, vector<16x32xf32>
      %c0_14 = arith.constant 0 : index
      %c0_15 = arith.constant 0 : index
      %c0_16 = arith.constant 0 : index
      %24 = vector.load %arg10[%c0_14, %c0_15, %c0_16] : memref<1x16x32xf32, #tpu.memory_space<vmem>>, vector<1x16x32xf32>
      %25 = vector.shape_cast %24 : vector<1x16x32xf32> to vector<16x32xf32>
      %cst_17 = arith.constant dense<0.000000e+00> : vector<16x32xf32>
      %26 = tpu.matmul %22, %25, %cst_17 {dimension_numbers = #tpu.dot_dimension_numbers<[1], [0], [0], [1], [0, 0, 1, 1], [], []>} : vector<16x16xf32>, vector<16x32xf32>, vector<16x32xf32> -> vector<16x32xf32>
      %27 = arith.addf %23, %26 : vector<16x32xf32>
      %c0_18 = arith.constant 0 : index
      %c0_19 = arith.constant 0 : index
      %28 = vector.load %arg16[%c0_18, %c0_19] : memref<16x32xf32, #tpu.memory_space<vmem>>, vector<16x32xf32>
      tpu.vector_store %arg16[%c0_18, %c0_19], %27 {strides = array<i32>} : memref<16x32xf32, #tpu.memory_space<vmem>>, vector<16x32xf32>,
      %c1_i32 = arith.constant 1 : i32
      %29 = arith.cmpi eq, %arg2, %c1_i32 : i32
      %30 = arith.extui %29 : i1 to i32
      %c0_i32_20 = arith.constant 0 : i32
      %31 = arith.cmpi ne, %30, %c0_i32_20 : i32
      scf.if %31 {
        %c0_21 = arith.constant 0 : index
        %c0_22 = arith.constant 0 : index
        %32 = vector.load %arg16[%c0_21, %c0_22] : memref<16x32xf32, #tpu.memory_space<vmem>>, vector<16x32xf32>
        %c0_23 = arith.constant 0 : index
        %c0_24 = arith.constant 0 : index
        %c0_25 = arith.constant 0 : index
        %33 = vector.load %arg11[%c0_23, %c0_24, %c0_25] : memref<1x16x32xf32, #tpu.memory_space<vmem>>, vector<1x16x32xf32>
        %34 = vector.shape_cast %33 : vector<1x16x32xf32> to vector<16x32xf32>
        %35 = vector.shape_cast %32 : vector<16x32xf32> to vector<1x16x32xf32>
        tpu.vector_store %arg11[%c0_23, %c0_24, %c0_25], %35 {strides = array<i32>} : memref<1x16x32xf32, #tpu.memory_space<vmem>>, vector<1x16x32xf32>,
      } else {
      }
    } else {
    }
    return
  }
  func.func @transform_0(%arg0: i32, %arg1: i32, %arg2: i32, %arg3: i32) -> (i32, i32, i32) {
    %c0_i32 = arith.constant 0 : i32
    %c0_i32_0 = arith.constant 0 : i32
    return %arg0, %arg1, %c0_i32 : i32, i32, i32
  }
  func.func @transform_1(%arg0: i32, %arg1: i32, %arg2: i32, %arg3: i32) -> (i32, i32, i32) {
    %c0_i32 = arith.constant 0 : i32
    %c0_i32_0 = arith.constant 0 : i32
    return %arg0, %arg3, %c0_i32 : i32, i32, i32
  }
  func.func @transform_2(%arg0: i32, %arg1: i32, %arg2: i32, %arg3: i32) -> (i32, i32, i32) {
    %c0_i32 = arith.constant 0 : i32
    %c0_i32_0 = arith.constant 0 : i32
    return %arg0, %arg3, %c0_i32 : i32, i32, i32
  }
  func.func @transform_3(%arg0: i32, %arg1: i32, %arg2: i32, %arg3: i32) -> (i32, i32, i32) {
    %c0_i32 = arith.constant 0 : i32
    %c0_i32_0 = arith.constant 0 : i32
    %c0_i32_1 = arith.constant 0 : i32
    return %arg2, %c0_i32, %c0_i32_0 : i32, i32, i32
  }
  func.func @transform_4(%arg0: i32, %arg1: i32, %arg2: i32, %arg3: i32) -> (i32, i32, i32) {
    %c0_i32 = arith.constant 0 : i32
    %c0_i32_0 = arith.constant 0 : i32
    %c0_i32_1 = arith.constant 0 : i32
    return %arg2, %c0_i32, %c0_i32_0 : i32, i32, i32
  }
  func.func @transform_5(%arg0: i32, %arg1: i32, %arg2: i32, %arg3: i32) -> (i32, i32, i32) {
    %c0_i32 = arith.constant 0 : i32
    %c0_i32_0 = arith.constant 0 : i32
    %c0_i32_1 = arith.constant 0 : i32
    return %arg2, %c0_i32, %c0_i32_0 : i32, i32, i32
  }
  func.func @transform_6(%arg0: i32, %arg1: i32, %arg2: i32, %arg3: i32) -> (i32, i32, i32) {
    %c0_i32 = arith.constant 0 : i32
    %c0_i32_0 = arith.constant 0 : i32
    %c0_i32_1 = arith.constant 0 : i32
    return %arg2, %c0_i32, %c0_i32_0 : i32, i32, i32
  }
  func.func @transform_7(%arg0: i32, %arg1: i32, %arg2: i32, %arg3: i32) -> (i32, i32, i32) {
    %c0_i32 = arith.constant 0 : i32
    %c0_i32_0 = arith.constant 0 : i32
    return %arg0, %arg1, %c0_i32 : i32, i32, i32
  }
}

</mosaic_0001>

<llo_original>
// kernel: tpu_custom_call.1
$region0: #{tpu_custom_call.1}
  #allocation0 [shape = 'u32[]', space=smem, size = 0x4, offset = 0x4, fixed_abs, tag = 'smem constant byte address 0x4 - core index']
  #allocation1 [shape = 'u32[144,128]{1,0:T(1,128)}', space=vmem, size = 0x12000, scoped, tag = 'internal scratch']
  #allocation2 [shape = 'f32[16,16]{1,0:T(8,128)}', space=vmem, size = 0x2000, scoped, tag = 'scratch operand']
  #allocation3 [shape = 'f32[16,1]{1,0:T(8,128)}', space=vmem, size = 0x2000, scoped, tag = 'scratch operand']
  #allocation4 [shape = 'f32[16,1]{1,0:T(8,128)}', space=vmem, size = 0x2000, scoped, tag = 'scratch operand']
  #allocation5 [shape = 'f32[16,16]{1,0:T(8,128)}', space=vmem, size = 0x2000, scoped, tag = 'scratch operand']
  #allocation6 [shape = 'f32[16,32]{1,0:T(8,128)}', space=vmem, size = 0x2000, scoped, tag = 'scratch operand']
  %s0 = inlined_call_operand.vmem [shape: f32[2,16,32], index: 0, kind: input, shape index: {}]
  %s1 = inlined_call_operand.vmem [shape: f32[2,16,32], index: 1, kind: input, shape index: {}]
  %s2 = inlined_call_operand.vmem [shape: f32[2,16,32], index: 2, kind: input, shape index: {}]
  %s3 = inlined_call_operand.vmem [shape: f32[2,32,16], index: 3, kind: input, shape index: {}]
  %s4 = inlined_call_operand.vmem [shape: f32[2,32,16], index: 4, kind: input, shape index: {}]
  %s5 = inlined_call_operand.vmem [shape: f32[2,32,16], index: 5, kind: input, shape index: {}]
  %s6 = inlined_call_operand.vmem [shape: f32[2,16,32], index: 6, kind: input, shape index: {}]
  %s7 = inlined_call_operand.hbm [shape: f32[2,16,32], index: 7, kind: output, shape index: {}]
  %s8 = sld [smem:[#allocation0]]
  $region89: #{tpu_custom_call.1} parent=0
    _
  %s10 = ssub.s32 1, %s8
  %s11 = scalar_select 0, %s10, %s8
  $region1: #{tpu_custom_call.1} parent=0
    #allocation7 [shape = 'u8[16384]{0}', space=vmem, size = 0x4000, scoped, tag = 'output window, operand 0']
    #allocation8 [shape = 's32[2]{0}', space=sflag, size = 0x8, scoped, tag = 'scoped memory for tpu_custom_call.1']
    %12 = vsyncpa [#allocation8], 0
    %s13 = scalar_lea.sflag [#allocation8], 1
    %14 = vsyncpa %s13, 0
    loop: start=0, step=1, limit=6
    $region2: #{tpu_custom_call.1} parent=1 // loop_pre_header
      _
    $region3: #{tpu_custom_call.1} parent=1 // loop_header
      %s16 = sphi 0, %s20
      %p17 = scmp.ge.s32.totalorder %s16, 6
      %s23 = sphi 0, %s49
      %s24 = sphi 0, %s45
      %s25 = sphi 0, %s41
      %s26 = sphi 0, %s37
      %s27 = sphi 0, %s23
      %s28 = sphi 0, %s24
      %s29 = sphi 0, %s25
      %s30 = sphi 0, %s26
      %s31 = sphi 0, %s27
      %s32 = sphi 0, %s28
      %s33 = sphi 0, %s29
      %s34 = sphi 0, %s30
      %s54 = sphi 0, %s56
      %s57 = sphi 0, %s54
      %s58 = sphi 0, %s57
      %s74 = sphi 0, %s58
      %s82 = sphi 0, %s84
      %s85 = sphi 0, %s82
      %s86 = sphi 0, %s85
      %s102 = sphi 0, %s86
      %s110 = sphi 0, %s112
      %s113 = sphi 0, %s110
      %s114 = sphi 0, %s113
      %s130 = sphi 0, %s114
      %s136 = sphi 0, %s138
      %s139 = sphi 0, %s136
      %s140 = sphi 0, %s139
      %s156 = sphi 0, %s140
      %s162 = sphi 0, %s164
      %s165 = sphi 0, %s162
      %s166 = sphi 0, %s165
      %s182 = sphi 0, %s166
      %s188 = sphi 0, %s190
      %s191 = sphi 0, %s188
      %s192 = sphi 0, %s191
      %s208 = sphi 0, %s192
      %s214 = sphi 0, %s216
      %s217 = sphi 0, %s214
      %s218 = sphi 0, %s217
      %s234 = sphi 0, %s218
      %s242 = sphi 0, %s244
      %s245 = sphi 0, %s242
      %s246 = sphi 0, %s245
      %s262 = sphi 0, %s246
    $region4: #{tpu_custom_call.1} parent=1 // loop_header_branch
      %19 = sbr.rel (%p17) target = $region8
    $region5: #{tpu_custom_call.1} parent=1 // loop_body
      %s21 = ssub.s32 %s16, 1
      %s22 = ssub.s32 %s16, 2
      %s35 = sadd.s32 1, %s26
      %p36 = scmp.ge.s32.totalorder %s35, 1
      %s37 = scalar_select %p36, 0, %s35
      %s38 = sadd.s32 1, %s25
      %s39 = scalar_select %p36, %s38, %s25
      %p40 = scmp.ge.s32.totalorder %s39, 2
      %s41 = scalar_select %p40, 0, %s39
      %s42 = sadd.s32 1, %s24
      %s43 = scalar_select %p40, %s42, %s24
      %p44 = scmp.ge.s32.totalorder %s43, 1
      %s45 = scalar_select %p44, 0, %s43
      %s46 = sadd.s32 1, %s23
      %s47 = scalar_select %p44, %s46, %s23
      %p48 = scmp.ge.s32.totalorder %s47, 2
      %s49 = scalar_select %p48, 0, %s47
      %s50 = ssub.s32 %s23, %s49
      %s51 = ssub.s32 %s24, %s45
      %s52 = sor.u32 %s50, %s51
      %p53 = scmp.eq.s32.totalorder %s52, 0
      %s55 = sadd.s32 %s54, 1
      %s56 = scalar_select %p53, %s54, %s55
      %p59 = pneg %p53
      %p60 = scmp.eq.s32.totalorder %s16, 3
      %p61 = por %p59, %p60
      %p62 = scmp.ne.s32.totalorder %s54, %s57
      %p63 = scmp.eq.s32.totalorder %s16, 0
      %p64 = por %p62, %p63
      %p65 = scmp.ne.s32.totalorder %s54, %s57
      %p66 = scmp.eq.s32.totalorder %s21, 3
      %p67 = por %p65, %p66
      %p68 = scmp.ne.s32.totalorder %s57, %s58
      %p69 = scmp.eq.s32.totalorder %s21, 0
      %p70 = por %p68, %p69
      %p71 = scmp.ne.s32.totalorder %s57, %s58
      %p72 = scmp.eq.s32.totalorder %s22, 3
      %p73 = por %p71, %p72
      %p75 = scmp.ne.s32.totalorder %s58, %s74
      %p76 = scmp.eq.s32.totalorder %s22, 0
      %p77 = por %p75, %p76
      %s78 = ssub.s32 %s23, %s49
      %s79 = ssub.s32 %s26, %s37
      %s80 = sor.u32 %s78, %s79
      %p81 = scmp.eq.s32.totalorder %s80, 0
      %s83 = sadd.s32 %s82, 1
      %s84 = scalar_select %p81, %s82, %s83
      %p87 = pneg %p81
      %p88 = scmp.eq.s32.totalorder %s16, 3
      %p89 = por %p87, %p88
      %p90 = scmp.ne.s32.totalorder %s82, %s85
      %p91 = scmp.eq.s32.totalorder %s16, 0
      %p92 = por %p90, %p91
      %p93 = scmp.ne.s32.totalorder %s82, %s85
      %p94 = scmp.eq.s32.totalorder %s21, 3
      %p95 = por %p93, %p94
      %p96 = scmp.ne.s32.totalorder %s85, %s86
      %p97 = scmp.eq.s32.totalorder %s21, 0
      %p98 = por %p96, %p97
      %p99 = scmp.ne.s32.totalorder %s85, %s86
      %p100 = scmp.eq.s32.totalorder %s22, 3
      %p101 = por %p99, %p100
      %p103 = scmp.ne.s32.totalorder %s86, %s102
      %p104 = scmp.eq.s32.totalorder %s22, 0
      %p105 = por %p103, %p104
      %s106 = ssub.s32 %s23, %s49
      %s107 = ssub.s32 %s26, %s37
      %s108 = sor.u32 %s106, %s107
      %p109 = scmp.eq.s32.totalorder %s108, 0
      %s111 = sadd.s32 %s110, 1
      %s112 = scalar_select %p109, %s110, %s111
      %p115 = pneg %p109
      %p116 = scmp.eq.s32.totalorder %s16, 3
      %p117 = por %p115, %p116
      %p118 = scmp.ne.s32.totalorder %s110, %s113
      %p119 = scmp.eq.s32.totalorder %s16, 0
      %p120 = por %p118, %p119
      %p121 = scmp.ne.s32.totalorder %s110, %s113
      %p122 = scmp.eq.s32.totalorder %s21, 3
      %p123 = por %p121, %p122
      %p124 = scmp.ne.s32.totalorder %s113, %s114
      %p125 = scmp.eq.s32.totalorder %s21, 0
      %p126 = por %p124, %p125
      %p127 = scmp.ne.s32.totalorder %s113, %s114
      %p128 = scmp.eq.s32.totalorder %s22, 3
      %p129 = por %p127, %p128
      %p131 = scmp.ne.s32.totalorder %s114, %s130
      %p132 = scmp.eq.s32.totalorder %s22, 0
      %p133 = por %p131, %p132
      %s134 = ssub.s32 %s25, %s41
      %p135 = scmp.eq.s32.totalorder %s134, 0
      %s137 = sadd.s32 %s136, 1
      %s138 = scalar_select %p135, %s136, %s137
      %p141 = pneg %p135
      %p142 = scmp.eq.s32.totalorder %s16, 3
      %p143 = por %p141, %p142
      %p144 = scmp.ne.s32.totalorder %s136, %s139
      %p145 = scmp.eq.s32.totalorder %s16, 0
      %p146 = por %p144, %p145
      %p147 = scmp.ne.s32.totalorder %s136, %s139
      %p148 = scmp.eq.s32.totalorder %s21, 3
      %p149 = por %p147, %p148
      %p150 = scmp.ne.s32.totalorder %s139, %s140
      %p151 = scmp.eq.s32.totalorder %s21, 0
      %p152 = por %p150, %p151
      %p153 = scmp.ne.s32.totalorder %s139, %s140
      %p154 = scmp.eq.s32.totalorder %s22, 3
      %p155 = por %p153, %p154
      %p157 = scmp.ne.s32.totalorder %s140, %s156
      %p158 = scmp.eq.s32.totalorder %s22, 0
      %p159 = por %p157, %p158
      %s160 = ssub.s32 %s25, %s41
      %p161 = scmp.eq.s32.totalorder %s160, 0
      %s163 = sadd.s32 %s162, 1
      %s164 = scalar_select %p161, %s162, %s163
      %p167 = pneg %p161
      %p168 = scmp.eq.s32.totalorder %s16, 3
      %p169 = por %p167, %p168
      %p170 = scmp.ne.s32.totalorder %s162, %s165
      %p171 = scmp.eq.s32.totalorder %s16, 0
      %p172 = por %p170, %p171
      %p173 = scmp.ne.s32.totalorder %s162, %s165
      %p174 = scmp.eq.s32.totalorder %s21, 3
      %p175 = por %p173, %p174
      %p176 = scmp.ne.s32.totalorder %s165, %s166
      %p177 = scmp.eq.s32.totalorder %s21, 0
      %p178 = por %p176, %p177
      %p179 = scmp.ne.s32.totalorder %s165, %s166
      %p180 = scmp.eq.s32.totalorder %s22, 3
      %p181 = por %p179, %p180
      %p183 = scmp.ne.s32.totalorder %s166, %s182
      %p184 = scmp.eq.s32.totalorder %s22, 0
      %p185 = por %p183, %p184
      %s186 = ssub.s32 %s25, %s41
      %p187 = scmp.eq.s32.totalorder %s186, 0
      %s189 = sadd.s32 %s188, 1
      %s190 = scalar_select %p187, %s188, %s189
      %p193 = pneg %p187
      %p194 = scmp.eq.s32.totalorder %s16, 3
      %p195 = por %p193, %p194
      %p196 = scmp.ne.s32.totalorder %s188, %s191
      %p197 = scmp.eq.s32.totalorder %s16, 0
      %p198 = por %p196, %p197
      %p199 = scmp.ne.s32.totalorder %s188, %s191
      %p200 = scmp.eq.s32.totalorder %s21, 3
      %p201 = por %p199, %p200
      %p202 = scmp.ne.s32.totalorder %s191, %s192
      %p203 = scmp.eq.s32.totalorder %s21, 0
      %p204 = por %p202, %p203
      %p205 = scmp.ne.s32.totalorder %s191, %s192
      %p206 = scmp.eq.s32.totalorder %s22, 3
      %p207 = por %p205, %p206
      %p209 = scmp.ne.s32.totalorder %s192, %s208
      %p210 = scmp.eq.s32.totalorder %s22, 0
      %p211 = por %p209, %p210
      %s212 = ssub.s32 %s25, %s41
      %p213 = scmp.eq.s32.totalorder %s212, 0
      %s215 = sadd.s32 %s214, 1
      %s216 = scalar_select %p213, %s214, %s215
      %p219 = pneg %p213
      %p220 = scmp.eq.s32.totalorder %s16, 3
      %p221 = por %p219, %p220
      %p222 = scmp.ne.s32.totalorder %s214, %s217
      %p223 = scmp.eq.s32.totalorder %s16, 0
      %p224 = por %p222, %p223
      %p225 = scmp.ne.s32.totalorder %s214, %s217
      %p226 = scmp.eq.s32.totalorder %s21, 3
      %p227 = por %p225, %p226
      %p228 = scmp.ne.s32.totalorder %s217, %s218
      %p229 = scmp.eq.s32.totalorder %s21, 0
      %p230 = por %p228, %p229
      %p231 = scmp.ne.s32.totalorder %s217, %s218
      %p232 = scmp.eq.s32.totalorder %s22, 3
      %p233 = por %p231, %p232
      %p235 = scmp.ne.s32.totalorder %s218, %s234
      %p236 = scmp.eq.s32.totalorder %s22, 0
      %p237 = por %p235, %p236
      %s238 = ssub.s32 %s23, %s49
      %s239 = ssub.s32 %s24, %s45
      %s240 = sor.u32 %s238, %s239
      %p241 = scmp.eq.s32.totalorder %s240, 0
      %s243 = sadd.s32 %s242, 1
      %s244 = scalar_select %p241, %s242, %s243
      %p247 = pneg %p241
      %p248 = scmp.eq.s32.totalorder %s16, 3
      %p249 = por %p247, %p248
      %p250 = scmp.ne.s32.totalorder %s242, %s245
      %p251 = scmp.eq.s32.totalorder %s16, 0
      %p252 = por %p250, %p251
      %p253 = scmp.ne.s32.totalorder %s242, %s245
      %p254 = scmp.eq.s32.totalorder %s21, 3
      %p255 = por %p253, %p254
      %p256 = scmp.ne.s32.totalorder %s245, %s246
      %p257 = scmp.eq.s32.totalorder %s21, 0
      %p258 = por %p256, %p257
      %p259 = scmp.ne.s32.totalorder %s245, %s246
      %p260 = scmp.eq.s32.totalorder %s22, 3
      %p261 = por %p259, %p260
      %p263 = scmp.ne.s32.totalorder %s246, %s262
      %p264 = scmp.eq.s32.totalorder %s22, 0
      %p265 = por %p263, %p264
      %p266 = scmp.le.s32.totalorder 1, %s16
      %p267 = scmp.lt.s32.totalorder %s16, 5
      %p268 = pnand %p266, %p267
      %p269 = pneg %p268
      // Predicated region
      $region9: #{tpu_custom_call.1} parent=5 // pred_check
        _
      $region10: #{tpu_custom_call.1} parent=5 // pred_check_branch
        %271 = sbr.rel (%p268) target = $region12
      $region11: #{tpu_custom_call.1} parent=5 // pred_region
        %s272 = ssub.s32 %s16, 1
      $region12: #{tpu_custom_call.1} parent=5 // pred_fallthru
        _
      %p273 = scmp.lt.s32.totalorder %s16, 4
      // Predicated region
      $region13: #{tpu_custom_call.1} parent=5 // pred_check
        %p274 = pneg %p273
      $region14: #{tpu_custom_call.1} parent=5 // pred_check_branch
        %276 = sbr.rel (%p274) target = $region16
      $region15: #{tpu_custom_call.1} parent=5 // pred_region
        // Predicated region
        $region17: #{tpu_custom_call.1} parent=15 // pred_check
          %p277 = pneg %p64
        $region18: #{tpu_custom_call.1} parent=15 // pred_check_branch
          %279 = sbr.rel (%p277) target = $region20
        $region19: #{tpu_custom_call.1} parent=15 // pred_region
          %s280 = smul.u32 2, %s24
          %p281 = scmp.lt.s32.totalorder %s23, 1
          %s282 = scalar_select %p281, %s23, 1
          %p283 = scmp.lt.s32.totalorder %s280, 1
          %s284 = scalar_select %p283, %s280, 1
          %s285 = smul.addr %s282, 2
          %s286 = sadd.s32 %s284, %s285
          %s287 = smul.addr %s286, 8
          %s288 = scalar_lea.vmem %s0, %s287
          %s289 = smul.u32 2, %s24
        $region20: #{tpu_custom_call.1} parent=15 // pred_fallthru
          _
        // Predicated region
        $region21: #{tpu_custom_call.1} parent=15 // pred_check
          %p290 = pneg %p92
        $region22: #{tpu_custom_call.1} parent=15 // pred_check_branch
          %292 = sbr.rel (%p290) target = $region24
        $region23: #{tpu_custom_call.1} parent=15 // pred_region
          %s293 = smul.u32 2, %s26
          %p294 = scmp.lt.s32.totalorder %s23, 1
          %s295 = scalar_select %p294, %s23, 1
          %p296 = scmp.lt.s32.totalorder %s293, 1
          %s297 = scalar_select %p296, %s293, 1
          %s298 = smul.addr %s295, 2
          %s299 = sadd.s32 %s297, %s298
          %s300 = smul.addr %s299, 8
          %s301 = scalar_lea.vmem %s1, %s300
          %s302 = smul.u32 2, %s26
        $region24: #{tpu_custom_call.1} parent=15 // pred_fallthru
          _
        // Predicated region
        $region25: #{tpu_custom_call.1} parent=15 // pred_check
          %p303 = pneg %p120
        $region26: #{tpu_custom_call.1} parent=15 // pred_check_branch
          %305 = sbr.rel (%p303) target = $region28
        $region27: #{tpu_custom_call.1} parent=15 // pred_region
          %s306 = smul.u32 2, %s26
          %p307 = scmp.lt.s32.totalorder %s23, 1
          %s308 = scalar_select %p307, %s23, 1
          %p309 = scmp.lt.s32.totalorder %s306, 1
          %s310 = scalar_select %p309, %s306, 1
          %s311 = smul.addr %s308, 2
          %s312 = sadd.s32 %s310, %s311
          %s313 = smul.addr %s312, 8
          %s314 = scalar_lea.vmem %s2, %s313
          %s315 = smul.u32 2, %s26
        $region28: #{tpu_custom_call.1} parent=15 // pred_fallthru
          _
        // Predicated region
        $region29: #{tpu_custom_call.1} parent=15 // pred_check
          %p316 = pneg %p146
        $region30: #{tpu_custom_call.1} parent=15 // pred_check_branch
          %318 = sbr.rel (%p316) target = $region32
        $region31: #{tpu_custom_call.1} parent=15 // pred_region
          %p319 = scmp.lt.s32.totalorder %s25, 1
          %s320 = scalar_select %p319, %s25, 1
          %s321 = smul.addr %s320, 4
          %s322 = smul.addr %s321, 8
          %s323 = scalar_lea.vmem %s3, %s322
        $region32: #{tpu_custom_call.1} parent=15 // pred_fallthru
          _
        // Predicated region
        $region33: #{tpu_custom_call.1} parent=15 // pred_check
          %p324 = pneg %p172
        $region34: #{tpu_custom_call.1} parent=15 // pred_check_branch
          %326 = sbr.rel (%p324) target = $region36
        $region35: #{tpu_custom_call.1} parent=15 // pred_region
          %p327 = scmp.lt.s32.totalorder %s25, 1
          %s328 = scalar_select %p327, %s25, 1
          %s329 = smul.addr %s328, 4
          %s330 = smul.addr %s329, 8
          %s331 = scalar_lea.vmem %s4, %s330
        $region36: #{tpu_custom_call.1} parent=15 // pred_fallthru
          _
        // Predicated region
        $region37: #{tpu_custom_call.1} parent=15 // pred_check
          %p332 = pneg %p198
        $region38: #{tpu_custom_call.1} parent=15 // pred_check_branch
          %334 = sbr.rel (%p332) target = $region40
        $region39: #{tpu_custom_call.1} parent=15 // pred_region
          %p335 = scmp.lt.s32.totalorder %s25, 1
          %s336 = scalar_select %p335, %s25, 1
          %s337 = smul.addr %s336, 4
          %s338 = smul.addr %s337, 8
          %s339 = scalar_lea.vmem %s5, %s338
        $region40: #{tpu_custom_call.1} parent=15 // pred_fallthru
          _
        // Predicated region
        $region41: #{tpu_custom_call.1} parent=15 // pred_check
          %p340 = pneg %p224
        $region42: #{tpu_custom_call.1} parent=15 // pred_check_branch
          %342 = sbr.rel (%p340) target = $region44
        $region43: #{tpu_custom_call.1} parent=15 // pred_region
          %p343 = scmp.lt.s32.totalorder %s25, 1
          %s344 = scalar_select %p343, %s25, 1
          %s345 = smul.addr %s344, 2
          %s346 = smul.addr %s345, 8
          %s347 = scalar_lea.vmem %s6, %s346
        $region44: #{tpu_custom_call.1} parent=15 // pred_fallthru
          _
      $region16: #{tpu_custom_call.1} parent=5 // pred_fallthru
        _
      %p348 = scmp.le.s32.totalorder 1, %s16
      %p349 = scmp.lt.s32.totalorder %s16, 5
      %p350 = pnand %p348, %p349
      %p351 = pneg %p350
      // Predicated region
      $region45: #{tpu_custom_call.1} parent=5 // pred_check
        _
      $region46: #{tpu_custom_call.1} parent=5 // pred_check_branch
        %353 = sbr.rel (%p350) target = $region48
      $region47: #{tpu_custom_call.1} parent=5 // pred_region
        %s354 = ssub.s32 %s16, 1
        %s355 = smul.u32 2, %s28
        %p356 = scmp.lt.s32.totalorder %s27, 1
        %s357 = scalar_select %p356, %s27, 1
        %p358 = scmp.lt.s32.totalorder %s355, 1
        %s359 = scalar_select %p358, %s355, 1
        %s360 = smul.addr %s357, 2
        %s361 = sadd.s32 %s359, %s360
        %s362 = smul.addr %s361, 8
        %s363 = scalar_lea.vmem %s0, %s362
        %p364 = pneg %p70
        %p365 = pneg %p67
        %s366 = smul.u32 2, %s30
        %p367 = scmp.lt.s32.totalorder %s27, 1
        %s368 = scalar_select %p367, %s27, 1
        %p369 = scmp.lt.s32.totalorder %s366, 1
        %s370 = scalar_select %p369, %s366, 1
        %s371 = smul.addr %s368, 2
        %s372 = sadd.s32 %s370, %s371
        %s373 = smul.addr %s372, 8
        %s374 = scalar_lea.vmem %s1, %s373
        %p375 = pneg %p98
        %p376 = pneg %p95
        %s377 = smul.u32 2, %s30
        %p378 = scmp.lt.s32.totalorder %s27, 1
        %s379 = scalar_select %p378, %s27, 1
        %p380 = scmp.lt.s32.totalorder %s377, 1
        %s381 = scalar_select %p380, %s377, 1
        %s382 = smul.addr %s379, 2
        %s383 = sadd.s32 %s381, %s382
        %s384 = smul.addr %s383, 8
        %s385 = scalar_lea.vmem %s2, %s384
        %p386 = pneg %p126
        %p387 = pneg %p123
        %p388 = scmp.lt.s32.totalorder %s29, 1
        %s389 = scalar_select %p388, %s29, 1
        %s390 = smul.addr %s389, 4
        %s391 = smul.addr %s390, 8
        %s392 = scalar_lea.vmem %s3, %s391
        %p393 = pneg %p152
        %p394 = pneg %p149
        %p395 = scmp.lt.s32.totalorder %s29, 1
        %s396 = scalar_select %p395, %s29, 1
        %s397 = smul.addr %s396, 4
        %s398 = smul.addr %s397, 8
        %s399 = scalar_lea.vmem %s4, %s398
        %p400 = pneg %p178
        %p401 = pneg %p175
        %p402 = scmp.lt.s32.totalorder %s29, 1
        %s403 = scalar_select %p402, %s29, 1
        %s404 = smul.addr %s403, 4
        %s405 = smul.addr %s404, 8
        %s406 = scalar_lea.vmem %s5, %s405
        %p407 = pneg %p204
        %p408 = pneg %p201
        %p409 = scmp.lt.s32.totalorder %s29, 1
        %s410 = scalar_select %p409, %s29, 1
        %s411 = smul.addr %s410, 2
        %s412 = smul.addr %s411, 8
        %s413 = scalar_lea.vmem %s6, %s412
        %p414 = pneg %p230
        %p415 = pneg %p227
        %p416 = pneg %p258
        %p417 = pneg %p255
        %s418 = sand.u32 %s245, 1
        %s419 = scalar_lea.sflag [#allocation8], %s418
        %s420 = sand.u32 %s245, 1
        %s421 = smul.addr %s420, 16
        %s422 = scalar_lea.vmem [#allocation7], %s421
        %s423 = smul.u32 2, %s28
        %p424 = scmp.lt.s32.totalorder %s27, 1
        %s425 = scalar_select %p424, %s27, 1
        %p426 = scmp.lt.s32.totalorder %s423, 1
        %s427 = scalar_select %p426, %s423, 1
        %s428 = smul.addr %s425, 2
        %s429 = sadd.s32 %s427, %s428
        %s430 = smul.addr %s429, 8
        %s431 = scalar_lea.vmem %s0, %s430
        %s432 = smul.u32 2, %s28
        %s433 = smul.u32 2, %s30
        %p434 = scmp.lt.s32.totalorder %s27, 1
        %s435 = scalar_select %p434, %s27, 1
        %p436 = scmp.lt.s32.totalorder %s433, 1
        %s437 = scalar_select %p436, %s433, 1
        %s438 = smul.addr %s435, 2
        %s439 = sadd.s32 %s437, %s438
        %s440 = smul.addr %s439, 8
        %s441 = scalar_lea.vmem %s1, %s440
        %s442 = smul.u32 2, %s30
        %s443 = smul.u32 2, %s30
        %p444 = scmp.lt.s32.totalorder %s27, 1
        %s445 = scalar_select %p444, %s27, 1
        %p446 = scmp.lt.s32.totalorder %s443, 1
        %s447 = scalar_select %p446, %s443, 1
        %s448 = smul.addr %s445, 2
        %s449 = sadd.s32 %s447, %s448
        %s450 = smul.addr %s449, 8
        %s451 = scalar_lea.vmem %s2, %s450
        %s452 = smul.u32 2, %s30
        %p453 = scmp.lt.s32.totalorder %s29, 1
        %s454 = scalar_select %p453, %s29, 1
        %s455 = smul.addr %s454, 4
        %s456 = smul.addr %s455, 8
        %s457 = scalar_lea.vmem %s3, %s456
        %p458 = scmp.lt.s32.totalorder %s29, 1
        %s459 = scalar_select %p458, %s29, 1
        %s460 = smul.addr %s459, 4
        %s461 = smul.addr %s460, 8
        %s462 = scalar_lea.vmem %s4, %s461
        %p463 = scmp.lt.s32.totalorder %s29, 1
        %s464 = scalar_select %p463, %s29, 1
        %s465 = smul.addr %s464, 4
        %s466 = smul.addr %s465, 8
        %s467 = scalar_lea.vmem %s5, %s466
        %p468 = scmp.lt.s32.totalorder %s29, 1
        %s469 = scalar_select %p468, %s29, 1
        %s470 = smul.addr %s469, 2
        %s471 = smul.addr %s470, 8
        %s472 = scalar_lea.vmem %s6, %s471
        %s473 = smul.u32 2, %s28
        %s474 = smul.u32 %s28, 16
        %s475 = smul.u32 %s30, 16
        %p476 = scmp.eq.s32.totalorder %s29, 0
        %p477 = scmp.eq.s32.totalorder %s30, 0
        %p478 = pnand %p476, %p477
        %p479 = pneg %p478
        // Predicated region
        $region49: #{tpu_custom_call.1} parent=47 // pred_check
          _
        $region50: #{tpu_custom_call.1} parent=47 // pred_check_branch
          %481 = sbr.rel (%p478) target = $region52
        $region51: #{tpu_custom_call.1} parent=47 // pred_region
          %vm482 = vcmask 261120
          %483 = vst.msk [vmem:[#allocation6] sm:$0xff] %vm482, 0.0
          %484 = vst.msk [vmem:[#allocation6 + $0x8] sm:$0xff] %vm482, 0.0
        $region52: #{tpu_custom_call.1} parent=47 // pred_fallthru
          _
        // Predicated region
        $region53: #{tpu_custom_call.1} parent=47 // pred_check
          %p485 = pneg %p477
        $region54: #{tpu_custom_call.1} parent=47 // pred_check_branch
          %487 = sbr.rel (%p485) target = $region56
        $region55: #{tpu_custom_call.1} parent=47 // pred_region
          %v488 = vld [vmem:[%s431] sm:$0xff]
          %v489 = vld [vmem:[%s431 + $0x8] sm:$0xff]
          %v490 = vld [vmem:[%s457] sm:$0xff]
          %v491 = vld [vmem:[%s457 + $0x8] sm:$0xff]
          %v492 = vld [vmem:[%s457 + $0x10] sm:$0xff]
          %v493 = vld [vmem:[%s457 + $0x18] sm:$0xff]
          %vm494 = vcmask 261120
          %v496 = vsel %vm494, %v488, 0
          %v499 = vsel %vm494, %v489, 0
          %501 = vmatprep.subr.mxu0 0.0
          %502 = vmatpush1.msra.mxu0 %v490
          %503 = vmatprep.subr.mxu0 0.0
          %504 = vmatpush1.msra.mxu0 %v491
          %505 = vmatprep.subr.mxu0 0.0
          %506 = vmatpush1.msra.mxu0 %v492
          %507 = vmatprep.subr.mxu0 0.0
          %508 = vmatpush1.msra.mxu0 %v493
          %509 = vmatprep.subr.mxu0 0.0
          %510 = vmatpush1.msra.mxu0 0.0
          %511 = vmatprep.subr.mxu0 0.0
          %512 = vmatpush1.msra.mxu0 0.0
          %513 = vmatprep.subr.mxu0 0.0
          %514 = vmatpush1.msra.mxu0 0.0
          %515 = vmatprep.subr.mxu0 0.0
          %516 = vmatpush1.msra.mxu0 0.0
          %517 = vmatprep.subr.mxu0 0.0
          %518 = vmatpush1.msra.mxu0 0.0
          %519 = vmatprep.subr.mxu0 0.0
          %520 = vmatpush1.msra.mxu0 0.0
          %521 = vmatprep.subr.mxu0 0.0
          %522 = vmatpush1.msra.mxu0 0.0
          %523 = vmatprep.subr.mxu0 0.0
          %524 = vmatpush1.msra.mxu0 0.0
          %525 = vmatprep.subr.mxu0 0.0
          %526 = vmatpush1.msra.mxu0 0.0
          %527 = vmatprep.subr.mxu0 0.0
          %528 = vmatpush1.msra.mxu0 0.0
          %529 = vmatprep.subr.mxu0 0.0
          %530 = vmatpush1.msra.mxu0 0.0
          %531 = vmatprep.subr.mxu0 0.0
          %532 = vmatpush1.msra.mxu0 0.0
          %533 = vmatprep.subr.mxu0 0.0
          %534 = vmatpush1.msra.mxu0 0.0
          %535 = vmatprep.subr.mxu0 0.0
          %536 = vmatpush1.msra.mxu0 0.0
          %537 = vmatprep.subr.mxu0 0.0
          %538 = vmatpush1.msra.mxu0 0.0
          %539 = vmatprep.subr.mxu0 0.0
          %540 = vmatpush1.msra.mxu0 0.0
          %541 = vmatprep.subr.mxu0 0.0
          %542 = vmatpush1.msra.mxu0 0.0
          %543 = vmatprep.subr.mxu0 0.0
          %544 = vmatpush1.msra.mxu0 0.0
          %545 = vmatprep.subr.mxu0 0.0
          %546 = vmatpush1.msra.mxu0 0.0
          %547 = vmatprep.subr.mxu0 0.0
          %548 = vmatpush1.msra.mxu0 0.0
          %549 = vmatprep.subr.mxu0 0.0
          %550 = vmatpush1.msra.mxu0 0.0
          %551 = vmatprep.subr.mxu0 0.0
          %552 = vmatpush1.msra.mxu0 0.0
          %553 = vmatprep.subr.mxu0 0.0
          %554 = vmatpush1.msra.mxu0 0.0
          %555 = vmatprep.subr.mxu0 0.0
          %556 = vmatpush1.msra.mxu0 0.0
          %557 = vmatprep.subr.mxu0 0.0
          %558 = vmatpush1.msra.mxu0 0.0
          %559 = vmatprep.subr.mxu0 0.0
          %560 = vmatpush1.msra.mxu0 0.0
          %561 = vmatprep.subr.mxu0 0.0
          %562 = vmatpush1.msra.mxu0 0.0
          %563 = vmatprep.subr.mxu0 0.0
          %564 = vmatpush1.msra.mxu0 0.0
          %565 = vmatprep.mubr.f32.mxu0 0.0
          %566 = vmatmul.mubr.f32.gmra.mrb[0].mxu0 %v496
          %v567 = vpop.f32.mrb[0].mxu0
          %v568 = vadd.f32 0.0, %v567
          %v569 = vpop.f32.mrb[0].mxu0
          %570 = vmatprep.mubr.f32.mxu0 0.0
          %571 = vmatmul.mubr.f32.gmra.mrb[0].mxu0 %v499
          %v572 = vpop.f32.mrb[0].mxu0
          %v573 = vadd.f32 0.0, %v572
          %v574 = vpop.f32.mrb[0].mxu0
          %575 = vdwg.mxu0
          %v576 = vmul.f32 %v568, 0.25
          %v577 = vmul.f32 %v573, 0.25
          %vm578 = vcmask 130048
          %579 = vst.msk [vmem:[#allocation2] sm:$0xff] %vm578, %v576
          %580 = vst.msk [vmem:[#allocation2 + $0x8] sm:$0xff] %vm578, %v577
          %vm581 = vcmask 7168
          %582 = vst.msk [vmem:[#allocation3] sm:$0xff] %vm581, -inf
          %583 = vst.msk [vmem:[#allocation3 + $0x8] sm:$0xff] %vm581, -inf
          %584 = vst.msk [vmem:[#allocation4] sm:$0xff] %vm581, 0.0
          %585 = vst.msk [vmem:[#allocation4 + $0x8] sm:$0xff] %vm581, 0.0
          %586 = vst.msk [vmem:[#allocation5] sm:$0xff] %vm578, 0.0
          %587 = vst.msk [vmem:[#allocation5 + $0x8] sm:$0xff] %vm578, 0.0
        $region56: #{tpu_custom_call.1} parent=47 // pred_fallthru
          _
        %s588 = sadd.s32 %s474, 16
        %p589 = scmp.lt.s32.totalorder %s475, %s588
        // Predicated region
        $region57: #{tpu_custom_call.1} parent=47 // pred_check
          %p590 = pneg %p589
        $region58: #{tpu_custom_call.1} parent=47 // pred_check_branch
          %592 = sbr.rel (%p590) target = $region60
        $region59: #{tpu_custom_call.1} parent=47 // pred_region
          %v593 = vld [vmem:[%s441] sm:$0xff]
          %v594 = vld [vmem:[%s441 + $0x8] sm:$0xff]
          %v595 = vld [vmem:[%s462] sm:$0xff]
          %v596 = vld [vmem:[%s462 + $0x8] sm:$0xff]
          %v597 = vld [vmem:[%s462 + $0x10] sm:$0xff]
          %v598 = vld [vmem:[%s462 + $0x18] sm:$0xff]
          %vm599 = vcmask 261120
          %v601 = vsel %vm599, %v593, 0
          %v604 = vsel %vm599, %v594, 0
          %606 = vmatprep.subr.mxu0 0.0
          %607 = vmatpush1.msra.mxu0 %v595
          %608 = vmatprep.subr.mxu0 0.0
          %609 = vmatpush1.msra.mxu0 %v596
          %610 = vmatprep.subr.mxu0 0.0
          %611 = vmatpush1.msra.mxu0 %v597
          %612 = vmatprep.subr.mxu0 0.0
          %613 = vmatpush1.msra.mxu0 %v598
          %614 = vmatprep.subr.mxu0 0.0
          %615 = vmatpush1.msra.mxu0 0.0
          %616 = vmatprep.subr.mxu0 0.0
          %617 = vmatpush1.msra.mxu0 0.0
          %618 = vmatprep.subr.mxu0 0.0
          %619 = vmatpush1.msra.mxu0 0.0
          %620 = vmatprep.subr.mxu0 0.0
          %621 = vmatpush1.msra.mxu0 0.0
          %622 = vmatprep.subr.mxu0 0.0
          %623 = vmatpush1.msra.mxu0 0.0
          %624 = vmatprep.subr.mxu0 0.0
          %625 = vmatpush1.msra.mxu0 0.0
          %626 = vmatprep.subr.mxu0 0.0
          %627 = vmatpush1.msra.mxu0 0.0
          %628 = vmatprep.subr.mxu0 0.0
          %629 = vmatpush1.msra.mxu0 0.0
          %630 = vmatprep.subr.mxu0 0.0
          %631 = vmatpush1.msra.mxu0 0.0
          %632 = vmatprep.subr.mxu0 0.0
          %633 = vmatpush1.msra.mxu0 0.0
          %634 = vmatprep.subr.mxu0 0.0
          %635 = vmatpush1.msra.mxu0 0.0
          %636 = vmatprep.subr.mxu0 0.0
          %637 = vmatpush1.msra.mxu0 0.0
          %638 = vmatprep.subr.mxu0 0.0
          %639 = vmatpush1.msra.mxu0 0.0
          %640 = vmatprep.subr.mxu0 0.0
          %641 = vmatpush1.msra.mxu0 0.0
          %642 = vmatprep.subr.mxu0 0.0
          %643 = vmatpush1.msra.mxu0 0.0
          %644 = vmatprep.subr.mxu0 0.0
          %645 = vmatpush1.msra.mxu0 0.0
          %646 = vmatprep.subr.mxu0 0.0
          %647 = vmatpush1.msra.mxu0 0.0
          %648 = vmatprep.subr.mxu0 0.0
          %649 = vmatpush1.msra.mxu0 0.0
          %650 = vmatprep.subr.mxu0 0.0
          %651 = vmatpush1.msra.mxu0 0.0
          %652 = vmatprep.subr.mxu0 0.0
          %653 = vmatpush1.msra.mxu0 0.0
          %654 = vmatprep.subr.mxu0 0.0
          %655 = vmatpush1.msra.mxu0 0.0
          %656 = vmatprep.subr.mxu0 0.0
          %657 = vmatpush1.msra.mxu0 0.0
          %658 = vmatprep.subr.mxu0 0.0
          %659 = vmatpush1.msra.mxu0 0.0
          %660 = vmatprep.subr.mxu0 0.0
          %661 = vmatpush1.msra.mxu0 0.0
          %662 = vmatprep.subr.mxu0 0.0
          %663 = vmatpush1.msra.mxu0 0.0
          %664 = vmatprep.subr.mxu0 0.0
          %665 = vmatpush1.msra.mxu0 0.0
          %666 = vmatprep.subr.mxu0 0.0
          %667 = vmatpush1.msra.mxu0 0.0
          %668 = vmatprep.subr.mxu0 0.0
          %669 = vmatpush1.msra.mxu0 0.0
          %670 = vmatprep.mubr.f32.mxu0 0.0
          %671 = vmatmul.mubr.f32.gmra.mrb[0].mxu0 %v601
          %v672 = vpop.f32.mrb[0].mxu0
          %v673 = vadd.f32 0.0, %v672
          %v674 = vpop.f32.mrb[0].mxu0
          %675 = vmatprep.mubr.f32.mxu0 0.0
          %676 = vmatmul.mubr.f32.gmra.mrb[0].mxu0 %v604
          %v677 = vpop.f32.mrb[0].mxu0
          %v678 = vadd.f32 0.0, %v677
          %v679 = vpop.f32.mrb[0].mxu0
          %680 = vdwg.mxu0
          %v681 = vld [vmem:[%s451] sm:$0xff]
          %v682 = vld [vmem:[%s451 + $0x8] sm:$0xff]
          %v683 = vld [vmem:[%s467] sm:$0xff]
          %v684 = vld [vmem:[%s467 + $0x8] sm:$0xff]
          %v685 = vld [vmem:[%s467 + $0x10] sm:$0xff]
          %v686 = vld [vmem:[%s467 + $0x18] sm:$0xff]
          %v688 = vsel %vm599, %v681, 0
          %v691 = vsel %vm599, %v682, 0
          %693 = vmatprep.subr.mxu0 0.0
          %694 = vmatpush1.msra.mxu0 %v683
          %695 = vmatprep.subr.mxu0 0.0
          %696 = vmatpush1.msra.mxu0 %v684
          %697 = vmatprep.subr.mxu0 0.0
          %698 = vmatpush1.msra.mxu0 %v685
          %699 = vmatprep.subr.mxu0 0.0
          %700 = vmatpush1.msra.mxu0 %v686
          %701 = vmatprep.subr.mxu0 0.0
          %702 = vmatpush1.msra.mxu0 0.0
          %703 = vmatprep.subr.mxu0 0.0
          %704 = vmatpush1.msra.mxu0 0.0
          %705 = vmatprep.subr.mxu0 0.0
          %706 = vmatpush1.msra.mxu0 0.0
          %707 = vmatprep.subr.mxu0 0.0
          %708 = vmatpush1.msra.mxu0 0.0
          %709 = vmatprep.subr.mxu0 0.0
          %710 = vmatpush1.msra.mxu0 0.0
          %711 = vmatprep.subr.mxu0 0.0
          %712 = vmatpush1.msra.mxu0 0.0
          %713 = vmatprep.subr.mxu0 0.0
          %714 = vmatpush1.msra.mxu0 0.0
          %715 = vmatprep.subr.mxu0 0.0
          %716 = vmatpush1.msra.mxu0 0.0
          %717 = vmatprep.subr.mxu0 0.0
          %718 = vmatpush1.msra.mxu0 0.0
          %719 = vmatprep.subr.mxu0 0.0
          %720 = vmatpush1.msra.mxu0 0.0
          %721 = vmatprep.subr.mxu0 0.0
          %722 = vmatpush1.msra.mxu0 0.0
          %723 = vmatprep.subr.mxu0 0.0
          %724 = vmatpush1.msra.mxu0 0.0
          %725 = vmatprep.subr.mxu0 0.0
          %726 = vmatpush1.msra.mxu0 0.0
          %727 = vmatprep.subr.mxu0 0.0
          %728 = vmatpush1.msra.mxu0 0.0
          %729 = vmatprep.subr.mxu0 0.0
          %730 = vmatpush1.msra.mxu0 0.0
          %731 = vmatprep.subr.mxu0 0.0
          %732 = vmatpush1.msra.mxu0 0.0
          %733 = vmatprep.subr.mxu0 0.0
          %734 = vmatpush1.msra.mxu0 0.0
          %735 = vmatprep.subr.mxu0 0.0
          %736 = vmatpush1.msra.mxu0 0.0
          %737 = vmatprep.subr.mxu0 0.0
          %738 = vmatpush1.msra.mxu0 0.0
          %739 = vmatprep.subr.mxu0 0.0
          %740 = vmatpush1.msra.mxu0 0.0
          %741 = vmatprep.subr.mxu0 0.0
          %742 = vmatpush1.msra.mxu0 0.0
          %743 = vmatprep.subr.mxu0 0.0
          %744 = vmatpush1.msra.mxu0 0.0
          %745 = vmatprep.subr.mxu0 0.0
          %746 = vmatpush1.msra.mxu0 0.0
          %747 = vmatprep.subr.mxu0 0.0
          %748 = vmatpush1.msra.mxu0 0.0
          %749 = vmatprep.subr.mxu0 0.0
          %750 = vmatpush1.msra.mxu0 0.0
          %751 = vmatprep.subr.mxu0 0.0
          %752 = vmatpush1.msra.mxu0 0.0
          %753 = vmatprep.subr.mxu0 0.0
          %754 = vmatpush1.msra.mxu0 0.0
          %755 = vmatprep.subr.mxu0 0.0
          %756 = vmatpush1.msra.mxu0 0.0
          %757 = vmatprep.mubr.f32.mxu0 0.0
          %758 = vmatmul.mubr.f32.gmra.mrb[0].mxu0 %v688
          %v759 = vpop.f32.mrb[0].mxu0
          %v760 = vadd.f32 0.0, %v759
          %v761 = vpop.f32.mrb[0].mxu0
          %762 = vmatprep.mubr.f32.mxu0 0.0
          %763 = vmatmul.mubr.f32.gmra.mrb[0].mxu0 %v691
          %v764 = vpop.f32.mrb[0].mxu0
          %v765 = vadd.f32 0.0, %v764
          %v766 = vpop.f32.mrb[0].mxu0
          %767 = vdwg.mxu0
          %v768 = vld [vmem:[#allocation2] sm:$0xff]
          %v769 = vld [vmem:[#allocation2 + $0x8] sm:$0xff]
          %vm770 = vcmask 130048
          %v772 = vsel %vm770, %v768, 0
          %v775 = vsel %vm770, %v769, 0
          %v778 = vsel %vm770, %v673, 0
          %v781 = vsel %vm770, %v678, 0
          %783 = vmatprep.subr.mxu0 0.0
          %784 = vmatpush1.xpose.msra.mxu0 %v778
          %785 = vmatprep.subr.mxu0 0.0
          %786 = vmatpush1.xpose.msra.mxu0 %v781
          %787 = vmatprep.subr.mxu0 0.0
          %788 = vmatpush1.xpose.msra.mxu0 0.0
          %789 = vmatprep.subr.mxu0 0.0
          %790 = vmatpush1.xpose.msra.mxu0 0.0
          %791 = vmatprep.subr.mxu0 0.0
          %792 = vmatpush1.xpose.msra.mxu0 0.0
          %793 = vmatprep.subr.mxu0 0.0
          %794 = vmatpush1.xpose.msra.mxu0 0.0
          %795 = vmatprep.subr.mxu0 0.0
          %796 = vmatpush1.xpose.msra.mxu0 0.0
          %797 = vmatprep.subr.mxu0 0.0
          %798 = vmatpush1.xpose.msra.mxu0 0.0
          %799 = vmatprep.subr.mxu0 0.0
          %800 = vmatpush1.xpose.msra.mxu0 0.0
          %801 = vmatprep.subr.mxu0 0.0
          %802 = vmatpush1.xpose.msra.mxu0 0.0
          %803 = vmatprep.subr.mxu0 0.0
          %804 = vmatpush1.xpose.msra.mxu0 0.0
          %805 = vmatprep.subr.mxu0 0.0
          %806 = vmatpush1.xpose.msra.mxu0 0.0
          %807 = vmatprep.subr.mxu0 0.0
          %808 = vmatpush1.xpose.msra.mxu0 0.0
          %809 = vmatprep.subr.mxu0 0.0
          %810 = vmatpush1.xpose.msra.mxu0 0.0
          %811 = vmatprep.subr.mxu0 0.0
          %812 = vmatpush1.xpose.msra.mxu0 0.0
          %813 = vmatprep.subr.mxu0 0.0
          %814 = vmatpush1.xpose.msra.mxu0 0.0
          %815 = vmatprep.subr.mxu0 0.0
          %816 = vmatpush1.xpose.msra.mxu0 0.0
          %817 = vmatprep.subr.mxu0 0.0
          %818 = vmatpush1.xpose.msra.mxu0 0.0
          %819 = vmatprep.subr.mxu0 0.0
          %820 = vmatpush1.xpose.msra.mxu0 0.0
          %821 = vmatprep.subr.mxu0 0.0
          %822 = vmatpush1.xpose.msra.mxu0 0.0
          %823 = vmatprep.subr.mxu0 0.0
          %824 = vmatpush1.xpose.msra.mxu0 0.0
          %825 = vmatprep.subr.mxu0 0.0
          %826 = vmatpush1.xpose.msra.mxu0 0.0
          %827 = vmatprep.subr.mxu0 0.0
          %828 = vmatpush1.xpose.msra.mxu0 0.0
          %829 = vmatprep.subr.mxu0 0.0
          %830 = vmatpush1.xpose.msra.mxu0 0.0
          %831 = vmatprep.subr.mxu0 0.0
          %832 = vmatpush1.xpose.msra.mxu0 0.0
          %833 = vmatprep.subr.mxu0 0.0
          %834 = vmatpush1.xpose.msra.mxu0 0.0
          %835 = vmatprep.subr.mxu0 0.0
          %836 = vmatpush1.xpose.msra.mxu0 0.0
          %837 = vmatprep.subr.mxu0 0.0
          %838 = vmatpush1.xpose.msra.mxu0 0.0
          %839 = vmatprep.subr.mxu0 0.0
          %840 = vmatpush1.xpose.msra.mxu0 0.0
          %841 = vmatprep.subr.mxu0 0.0
          %842 = vmatpush1.xpose.msra.mxu0 0.0
          %843 = vmatprep.subr.mxu0 0.0
          %844 = vmatpush1.xpose.msra.mxu0 0.0
          %845 = vmatprep.subr.mxu0 0.0
          %846 = vmatpush1.xpose.msra.mxu0 0.0
          %847 = vmatprep.mubr.f32.mxu0 0.0
          %848 = vmatmul.mubr.f32.gmra.mrb[0].mxu0 %v772
          %v849 = vpop.f32.mrb[0].mxu0
          %v850 = vadd.f32 0.0, %v849
          %v851 = vpop.f32.mrb[0].mxu0
          %852 = vmatprep.mubr.f32.mxu0 0.0
          %853 = vmatmul.mubr.f32.gmra.mrb[0].mxu0 %v775
          %v854 = vpop.f32.mrb[0].mxu0
          %v855 = vadd.f32 0.0, %v854
          %v856 = vpop.f32.mrb[0].mxu0
          %857 = vdwg.mxu0
          %s858 = sadd.s32 %s475, 15
          %p859 = scmp.gt.s32.totalorder %s858, %s474
          // Predicated region
          $region61: #{tpu_custom_call.1} parent=59 // pred_check
            %p860 = pneg %p859
          $region62: #{tpu_custom_call.1} parent=59 // pred_check_branch
            %862 = sbr.rel (%p860) target = $region64
          $region63: #{tpu_custom_call.1} parent=59 // pred_region
            %v863 = vlaneseq
            %v864 = vshrl.u32 %v863, 7
            %v865 = vadd.s32 %v864, 8
            %v866 = vstv %s474
            %v867 = vadd.s32 %v864, %v866
            %v868 = vadd.s32 %v865, %v866
            %v869 = vlaneseq
            %v870 = vand.u32 %v869, 127
            %v871 = vstv %s475
            %v872 = vadd.s32 %v870, %v871
            %vm873 = vcmp.le.s32.totalorder %v872, %v867
            %vm874 = vcmp.le.s32.totalorder %v872, %v868
            %v875 = vsel %vm873, %v850, -inf
            %v876 = vsel %vm874, %v855, -inf
          $region64: #{tpu_custom_call.1} parent=59 // pred_fallthru
            %v877 = vphi 0, %v875
            %v878 = vphi 0, %v876
          %p879 = pneg %p859
          // Predicated region
          $region65: #{tpu_custom_call.1} parent=59 // pred_check
            _
          $region66: #{tpu_custom_call.1} parent=59 // pred_check_branch
            %881 = sbr.rel (%p859) target = $region68
          $region67: #{tpu_custom_call.1} parent=59 // pred_region
            _
          $region68: #{tpu_custom_call.1} parent=59 // pred_fallthru
            %v882 = vphi %v877, %v850
            %v883 = vphi %v878, %v855
          %v884 = vld [vmem:[#allocation3] sm:$0xff]
          %v885 = vld [vmem:[#allocation3 + $0x8] sm:$0xff]
          %v886 = vsel %vm770, %v882, -inf
          %887 = vmax.xlane.f32.xlu0 %v886
          %v888 = vpop.xlane.xlu0 %887
          %v889 = vsel %vm770, %v883, -inf
          %890 = vmax.xlane.f32.xlu0 %v889
          %v891 = vpop.xlane.xlu0 %890
          %v892 = vmax.f32 %v884, %v888
          %v893 = vmax.f32 %v885, %v891
          %v894 = vsub.f32 %v884, %v892
          %v895 = vsub.f32 %v885, %v893
          %v896 = vmul.f32 %v894, 1.442695
          %v897 = vpow.pop %v896
          %v898 = vmul.f32 %v895, 1.442695
          %v899 = vpow.pop %v898
          %901 = vset.pattern.permute.xlu0 0
          %902 = vperm.xlu0 %901, %v892
          %v903 = vpop.permute.xlu0 %902
          %906 = vset.pattern.permute.xlu0 0
          %907 = vperm.xlu0 %906, %v893
          %v908 = vpop.permute.xlu0 %907
          %v910 = vsub.f32 %v882, %v903
          %v911 = vsub.f32 %v883, %v908
          %v912 = vmul.f32 %v910, 1.442695
          %v913 = vpow.pop %v912
          %v914 = vmul.f32 %v911, 1.442695
          %v915 = vpow.pop %v914
          %v916 = vld [vmem:[#allocation4] sm:$0xff]
          %v917 = vld [vmem:[#allocation4 + $0x8] sm:$0xff]
          %v918 = vmul.f32 %v897, %v916
          %v919 = vmul.f32 %v899, %v917
          %v920 = vsel %vm770, %v913, 0.0
          %921 = vadd.xlane.f32.xlu0 %v920
          %v922 = vpop.xlane.xlu0 %921
          %v923 = vsel %vm770, %v915, 0.0
          %924 = vadd.xlane.f32.xlu0 %v923
          %v925 = vpop.xlane.xlu0 %924
          %v926 = vadd.f32 %v918, %v922
          %v927 = vadd.f32 %v919, %v925
          %vm928 = vcmask 7168
          %929 = vst.msk [vmem:[#allocation4] sm:$0xff] %vm928, %v926
          %930 = vst.msk [vmem:[#allocation4 + $0x8] sm:$0xff] %vm928, %v927
          %v931 = vld [vmem:[#allocation5] sm:$0xff]
          %v932 = vld [vmem:[#allocation5 + $0x8] sm:$0xff]
          %934 = vset.pattern.permute.xlu0 0
          %935 = vperm.xlu0 %934, %v897
          %v936 = vpop.permute.xlu0 %935
          %939 = vset.pattern.permute.xlu0 0
          %940 = vperm.xlu0 %939, %v899
          %v941 = vpop.permute.xlu0 %940
          %v943 = vmul.f32 %v936, %v931
          %v944 = vmul.f32 %v941, %v932
          %v946 = vsel %vm770, %v913, 0
          %v949 = vsel %vm770, %v915, 0
          %951 = vmatprep.subr.mxu0 0.0
          %952 = vmatpush1.msra.mxu0 %v760
          %953 = vmatprep.subr.mxu0 0.0
          %954 = vmatpush1.msra.mxu0 %v765
          %955 = vmatprep.subr.mxu0 0.0
          %956 = vmatpush1.msra.mxu0 0.0
          %957 = vmatprep.subr.mxu0 0.0
          %958 = vmatpush1.msra.mxu0 0.0
          %959 = vmatprep.subr.mxu0 0.0
          %960 = vmatpush1.msra.mxu0 0.0
          %961 = vmatprep.subr.mxu0 0.0
          %962 = vmatpush1.msra.mxu0 0.0
          %963 = vmatprep.subr.mxu0 0.0
          %964 = vmatpush1.msra.mxu0 0.0
          %965 = vmatprep.subr.mxu0 0.0
          %966 = vmatpush1.msra.mxu0 0.0
          %967 = vmatprep.subr.mxu0 0.0
          %968 = vmatpush1.msra.mxu0 0.0
          %969 = vmatprep.subr.mxu0 0.0
          %970 = vmatpush1.msra.mxu0 0.0
          %971 = vmatprep.subr.mxu0 0.0
          %972 = vmatpush1.msra.mxu0 0.0
          %973 = vmatprep.subr.mxu0 0.0
          %974 = vmatpush1.msra.mxu0 0.0
          %975 = vmatprep.subr.mxu0 0.0
          %976 = vmatpush1.msra.mxu0 0.0
          %977 = vmatprep.subr.mxu0 0.0
          %978 = vmatpush1.msra.mxu0 0.0
          %979 = vmatprep.subr.mxu0 0.0
          %980 = vmatpush1.msra.mxu0 0.0
          %981 = vmatprep.subr.mxu0 0.0
          %982 = vmatpush1.msra.mxu0 0.0
          %983 = vmatprep.subr.mxu0 0.0
          %984 = vmatpush1.msra.mxu0 0.0
          %985 = vmatprep.subr.mxu0 0.0
          %986 = vmatpush1.msra.mxu0 0.0
          %987 = vmatprep.subr.mxu0 0.0
          %988 = vmatpush1.msra.mxu0 0.0
          %989 = vmatprep.subr.mxu0 0.0
          %990 = vmatpush1.msra.mxu0 0.0
          %991 = vmatprep.subr.mxu0 0.0
          %992 = vmatpush1.msra.mxu0 0.0
          %993 = vmatprep.subr.mxu0 0.0
          %994 = vmatpush1.msra.mxu0 0.0
          %995 = vmatprep.subr.mxu0 0.0
          %996 = vmatpush1.msra.mxu0 0.0
          %997 = vmatprep.subr.mxu0 0.0
          %998 = vmatpush1.msra.mxu0 0.0
          %999 = vmatprep.subr.mxu0 0.0
          %1000 = vmatpush1.msra.mxu0 0.0
          %1001 = vmatprep.subr.mxu0 0.0
          %1002 = vmatpush1.msra.mxu0 0.0
          %1003 = vmatprep.subr.mxu0 0.0
          %1004 = vmatpush1.msra.mxu0 0.0
          %1005 = vmatprep.subr.mxu0 0.0
          %1006 = vmatpush1.msra.mxu0 0.0
          %1007 = vmatprep.subr.mxu0 0.0
          %1008 = vmatpush1.msra.mxu0 0.0
          %1009 = vmatprep.subr.mxu0 0.0
          %1010 = vmatpush1.msra.mxu0 0.0
          %1011 = vmatprep.subr.mxu0 0.0
          %1012 = vmatpush1.msra.mxu0 0.0
          %1013 = vmatprep.subr.mxu0 0.0
          %1014 = vmatpush1.msra.mxu0 0.0
          %1015 = vmatprep.mubr.f32.mxu0 0.0
          %1016 = vmatmul.mubr.f32.gmra.mrb[0].mxu0 %v946
          %v1017 = vpop.f32.mrb[0].mxu0
          %v1018 = vadd.f32 0.0, %v1017
          %v1019 = vpop.f32.mrb[0].mxu0
          %1020 = vmatprep.mubr.f32.mxu0 0.0
          %1021 = vmatmul.mubr.f32.gmra.mrb[0].mxu0 %v949
          %v1022 = vpop.f32.mrb[0].mxu0
          %v1023 = vadd.f32 0.0, %v1022
          %v1024 = vpop.f32.mrb[0].mxu0
          %1025 = vdwg.mxu0
          %v1026 = vadd.f32 %v943, %v1018
          %v1027 = vadd.f32 %v944, %v1023
          %1028 = vst.msk [vmem:[#allocation5] sm:$0xff] %vm770, %v1026
          %1029 = vst.msk [vmem:[#allocation5 + $0x8] sm:$0xff] %vm770, %v1027
          %1030 = vst.msk [vmem:[#allocation3] sm:$0xff] %vm928, %v892
          %1031 = vst.msk [vmem:[#allocation3 + $0x8] sm:$0xff] %vm928, %v893
        $region60: #{tpu_custom_call.1} parent=47 // pred_fallthru
          _
        // Predicated region
        $region69: #{tpu_custom_call.1} parent=47 // pred_check
          %p1032 = pneg %p477
        $region70: #{tpu_custom_call.1} parent=47 // pred_check_branch
          %1034 = sbr.rel (%p1032) target = $region72
        $region71: #{tpu_custom_call.1} parent=47 // pred_region
          %v1035 = vld [vmem:[#allocation4] sm:$0xff]
          %v1036 = vld [vmem:[#allocation4 + $0x8] sm:$0xff]
          %v1037 = vrcp.pop %v1035
          %v1038 = vmul.f32 1.0, %v1037
          %v1039 = vrcp.pop %v1036
          %v1040 = vmul.f32 1.0, %v1039
          %v1041 = vld [vmem:[#allocation5] sm:$0xff]
          %v1042 = vld [vmem:[#allocation5 + $0x8] sm:$0xff]
          %1044 = vset.pattern.permute.xlu0 0
          %1045 = vperm.xlu0 %1044, %v1038
          %v1046 = vpop.permute.xlu0 %1045
          %1049 = vset.pattern.permute.xlu0 0
          %1050 = vperm.xlu0 %1049, %v1040
          %v1051 = vpop.permute.xlu0 %1050
          %v1053 = vmul.f32 %v1041, %v1046
          %v1054 = vmul.f32 %v1042, %v1051
          %v1055 = vld [vmem:[#allocation6] sm:$0xff]
          %v1056 = vld [vmem:[#allocation6 + $0x8] sm:$0xff]
          %v1057 = vld [vmem:[%s472] sm:$0xff]
          %v1058 = vld [vmem:[%s472 + $0x8] sm:$0xff]
          %vm1059 = vcmask 130048
          %v1061 = vsel %vm1059, %v1053, 0
          %v1064 = vsel %vm1059, %v1054, 0
          %1066 = vmatprep.subr.mxu0 0.0
          %1067 = vmatpush1.msra.mxu0 %v1057
          %1068 = vmatprep.subr.mxu0 0.0
          %1069 = vmatpush1.msra.mxu0 %v1058
          %1070 = vmatprep.subr.mxu0 0.0
          %1071 = vmatpush1.msra.mxu0 0.0
          %1072 = vmatprep.subr.mxu0 0.0
          %1073 = vmatpush1.msra.mxu0 0.0
          %1074 = vmatprep.subr.mxu0 0.0
          %1075 = vmatpush1.msra.mxu0 0.0
          %1076 = vmatprep.subr.mxu0 0.0
          %1077 = vmatpush1.msra.mxu0 0.0
          %1078 = vmatprep.subr.mxu0 0.0
          %1079 = vmatpush1.msra.mxu0 0.0
          %1080 = vmatprep.subr.mxu0 0.0
          %1081 = vmatpush1.msra.mxu0 0.0
          %1082 = vmatprep.subr.mxu0 0.0
          %1083 = vmatpush1.msra.mxu0 0.0
          %1084 = vmatprep.subr.mxu0 0.0
          %1085 = vmatpush1.msra.mxu0 0.0
          %1086 = vmatprep.subr.mxu0 0.0
          %1087 = vmatpush1.msra.mxu0 0.0
          %1088 = vmatprep.subr.mxu0 0.0
          %1089 = vmatpush1.msra.mxu0 0.0
          %1090 = vmatprep.subr.mxu0 0.0
          %1091 = vmatpush1.msra.mxu0 0.0
          %1092 = vmatprep.subr.mxu0 0.0
          %1093 = vmatpush1.msra.mxu0 0.0
          %1094 = vmatprep.subr.mxu0 0.0
          %1095 = vmatpush1.msra.mxu0 0.0
          %1096 = vmatprep.subr.mxu0 0.0
          %1097 = vmatpush1.msra.mxu0 0.0
          %1098 = vmatprep.subr.mxu0 0.0
          %1099 = vmatpush1.msra.mxu0 0.0
          %1100 = vmatprep.subr.mxu0 0.0
          %1101 = vmatpush1.msra.mxu0 0.0
          %1102 = vmatprep.subr.mxu0 0.0
          %1103 = vmatpush1.msra.mxu0 0.0
          %1104 = vmatprep.subr.mxu0 0.0
          %1105 = vmatpush1.msra.mxu0 0.0
          %1106 = vmatprep.subr.mxu0 0.0
          %1107 = vmatpush1.msra.mxu0 0.0
          %1108 = vmatprep.subr.mxu0 0.0
          %1109 = vmatpush1.msra.mxu0 0.0
          %1110 = vmatprep.subr.mxu0 0.0
          %1111 = vmatpush1.msra.mxu0 0.0
          %1112 = vmatprep.subr.mxu0 0.0
          %1113 = vmatpush1.msra.mxu0 0.0
          %1114 = vmatprep.subr.mxu0 0.0
          %1115 = vmatpush1.msra.mxu0 0.0
          %1116 = vmatprep.subr.mxu0 0.0
          %1117 = vmatpush1.msra.mxu0 0.0
          %1118 = vmatprep.subr.mxu0 0.0
          %1119 = vmatpush1.msra.mxu0 0.0
          %1120 = vmatprep.subr.mxu0 0.0
          %1121 = vmatpush1.msra.mxu0 0.0
          %1122 = vmatprep.subr.mxu0 0.0
          %1123 = vmatpush1.msra.mxu0 0.0
          %1124 = vmatprep.subr.mxu0 0.0
          %1125 = vmatpush1.msra.mxu0 0.0
          %1126 = vmatprep.subr.mxu0 0.0
          %1127 = vmatpush1.msra.mxu0 0.0
          %1128 = vmatprep.subr.mxu0 0.0
          %1129 = vmatpush1.msra.mxu0 0.0
          %1130 = vmatprep.mubr.f32.mxu0 0.0
          %1131 = vmatmul.mubr.f32.gmra.mrb[0].mxu0 %v1061
          %v1132 = vpop.f32.mrb[0].mxu0
          %v1133 = vadd.f32 0.0, %v1132
          %v1134 = vpop.f32.mrb[0].mxu0
          %1135 = vmatprep.mubr.f32.mxu0 0.0
          %1136 = vmatmul.mubr.f32.gmra.mrb[0].mxu0 %v1064
          %v1137 = vpop.f32.mrb[0].mxu0
          %v1138 = vadd.f32 0.0, %v1137
          %v1139 = vpop.f32.mrb[0].mxu0
          %1140 = vdwg.mxu0
          %v1141 = vadd.f32 %v1055, %v1133
          %v1142 = vadd.f32 %v1056, %v1138
          %vm1143 = vcmask 261120
          %1144 = vst.msk [vmem:[#allocation6] sm:$0xff] %vm1143, %v1141
          %1145 = vst.msk [vmem:[#allocation6 + $0x8] sm:$0xff] %vm1143, %v1142
          %p1146 = scmp.eq.s32.totalorder %s29, 1
          // Predicated region
          $region73: #{tpu_custom_call.1} parent=71 // pred_check
            %p1147 = pneg %p1146
          $region74: #{tpu_custom_call.1} parent=71 // pred_check_branch
            %1149 = sbr.rel (%p1147) target = $region76
          $region75: #{tpu_custom_call.1} parent=71 // pred_region
            %v1150 = vld [vmem:[#allocation6] sm:$0xff]
            %v1151 = vld [vmem:[#allocation6 + $0x8] sm:$0xff]
            %1152 = vst.msk [vmem:[%s422] sm:$0xff] %vm1143, %v1150
            %1153 = vst.msk [vmem:[%s422 + $0x8] sm:$0xff] %vm1143, %v1151
          $region76: #{tpu_custom_call.1} parent=71 // pred_fallthru
            _
        $region72: #{tpu_custom_call.1} parent=47 // pred_fallthru
          _
        %s1154 = sand.u32 %s245, 1
        %s1155 = scalar_lea.sflag [#allocation8], %s1154
        %s1156 = sand.u32 %s245, 1
        %s1157 = smul.addr %s1156, 16
        %s1158 = scalar_lea.vmem [#allocation7], %s1157
        // Predicated region
        $region77: #{tpu_custom_call.1} parent=47 // pred_check
          %p1159 = pneg %p255
        $region78: #{tpu_custom_call.1} parent=47 // pred_check_branch
          %1161 = sbr.rel (%p1159) target = $region80
        $region79: #{tpu_custom_call.1} parent=47 // pred_region
          %s1162 = smul.u32 2, %s28
          %s1164 = ssub.s32 256, 256
          %1165 = vsyncadd %s1155, %s1164
          %s1166 = smul.addr %s27, 2
          %s1167 = sadd.s32 %s1162, %s1166
          %s1168 = smul.addr %s1167, 128
          %s1169 = scalar_lea.hbm %s7, %s1168
          %s1170 = sshll.u32 %s1158, 4
          %s1171 = int_to_ptr.vmem [resolvable:$true] %s1170
          %1176 = dma.vmem_to_hbm [thread:$0]  %s1171, 256, %s1169, %s1155, 128, 128, 8
        $region80: #{tpu_custom_call.1} parent=47 // pred_fallthru
          _
      $region48: #{tpu_custom_call.1} parent=5 // pred_fallthru
        _
      %p1177 = scmp.le.s32.totalorder 2, %s16
      // Predicated region
      $region81: #{tpu_custom_call.1} parent=5 // pred_check
        %p1178 = pneg %p1177
      $region82: #{tpu_custom_call.1} parent=5 // pred_check_branch
        %1180 = sbr.rel (%p1178) target = $region84
      $region83: #{tpu_custom_call.1} parent=5 // pred_region
        %s1181 = ssub.s32 %s16, 2
        // Predicated region
        $region85: #{tpu_custom_call.1} parent=83 // pred_check
          %p1182 = pneg %p261
        $region86: #{tpu_custom_call.1} parent=83 // pred_check_branch
          %1184 = sbr.rel (%p1182) target = $region88
        $region87: #{tpu_custom_call.1} parent=83 // pred_region
          %s1185 = sand.u32 %s246, 1
          %s1186 = scalar_lea.sflag [#allocation8], %s1185
          %s1187 = sand.u32 %s246, 1
          %s1188 = smul.addr %s1187, 16
          %s1189 = scalar_lea.vmem [#allocation7], %s1188
          %1190 = dma.done %s1186, 256
        $region88: #{tpu_custom_call.1} parent=83 // pred_fallthru
          _
      $region84: #{tpu_custom_call.1} parent=5 // pred_fallthru
        _
    $region6: #{tpu_custom_call.1} parent=1 // loop_footer
      %s20 = sadd.s32 1, %s16
    $region7: #{tpu_custom_call.1} parent=1 // loop_footer_branch
      %15 = sbr.rel target = $region3
    $region8: #{tpu_custom_call.1} parent=1 // loop_exit
      _
    %1191 = vsyncpa [#allocation8], 1
    %s1192 = scalar_lea.sflag [#allocation8], 1
    %1193 = vsyncpa %s1192, 1

</llo_original>
